<compile_context>
chip_gen: v6e
topology: v6e:2x2x1
jax: 0.10.0
libtpu: 0.0.40
codegen_flags: <defaults>
</compile_context>

<pallas_src>
import functools

import jax
import jax.numpy as jnp
from jax import lax
from jax.experimental import pallas as pl
from jax.experimental.pallas import tpu as pltpu

IN_CH = 1
OUT_CH = 128
KSIZE = 5
K2 = KSIZE * KSIZE
CENTER = (KSIZE // 2) * KSIZE + KSIZE // 2          # = 12: center tap == the plane
NUM_STAGES = 9        # 8 repeats in the for-loop + 1 extra block before the final layer
PLANES_PER_STEP = 2   # keeps grid extent even (>=2) so v7x shards over both TCs


# ------------------------- fused denoiser Pallas kernel -------------------------
# Per grid step (PLANES_PER_STEP real/imag planes packed along the lane axis):
#   feat  = relu([W1|b1] @ [pat;1])                    MXU bf16, f32 acc, kept as value
#   P     = W2taps @ feat                              MXU bf16, (25, lanes)
#   conv2 = separable 5x5 shift-add of P               XLU rolls + precomputed masks
#   z     = pat[center] - conv2 - b2                   single lane-dense store
def _denoiser_kernel(b2_ref, pat_ref, w1_ref, w2_ref, vh_ref, vw_ref, o_ref, *, W):
    lanes = pat_ref.shape[-1]
    half = KSIZE // 2

    # ---- conv1 + bias (folded ones row) + ReLU (no VMEM scratch round-trip) ----
    pat = pat_ref[0]                                            # (K2+1, lanes) f32
    feat = jnp.dot(w1_ref[...], pat.astype(jnp.bfloat16),
                   preferred_element_type=jnp.float32)          # (128, lanes)
    feat = jnp.maximum(feat, 0.0)

    # ---- conv2 channel contraction: P[t, q] = sum_c w2[t, c] * feat[c, q] ----
    p_taps = jnp.dot(w2_ref[...], feat.astype(jnp.bfloat16),
                     preferred_element_type=jnp.float32)        # (25, lanes)

    # ---- separable 5x5 tap accumulation ----
    # Pass 1 (dh): q_rows[kw, r] = sum_kh P[(kh,kw), r + dh*W] * vh[kh, r]
    row_terms = []
    for kh in range(KSIZE):
        dh = kh - half
        slab = p_taps[kh * KSIZE:(kh + 1) * KSIZE, :]           # (5, lanes), shared dh
        if dh != 0:
            slab = pltpu.roll(slab, (-dh * W) % lanes, 1)       # out[r] = in[r + dh*W]
        row_terms.append(slab * vh_ref[kh:kh + 1, :])
    q_rows = ((row_terms[0] + row_terms[1]) + (row_terms[2] + row_terms[3])
              + row_terms[4])                                   # (5, lanes), kw-indexed

    # Pass 2 (dw): conv2[q] = sum_kw q_rows[kw, q + dw] * vw[kw, q]
    col_terms = []
    for kw in range(KSIZE):
        dw = kw - half
        row = q_rows[kw:kw + 1, :]                              # (1, lanes)
        if dw != 0:
            row = pltpu.roll(row, (-dw) % lanes, 1)             # out[q] = in[q + dw]
        col_terms.append(row * vw_ref[kw:kw + 1, :])
    conv2 = ((col_terms[0] + col_terms[1]) + (col_terms[2] + col_terms[3])
             + col_terms[4])                                    # (1, lanes)

    # ---- MinusLayer: z = conv1_input - (conv2 + b2); center tap row == plane (f32) ----
    center = pat_ref[0, CENTER:CENTER + 1, :]
    o_ref[0] = center - conv2 - b2_ref[0]


def fused_denoiser_call(pat, b2, w1m_bf, w2m_bf, vh, vw, H, W):
    """pat: (G, K2+1, lanes) f32 with a trailing ones row -> z: (G, 1, lanes) f32."""
    G, KR, lanes = pat.shape
    kernel = functools.partial(_denoiser_kernel, W=W)
    return pl.pallas_call(
        kernel,
        out_shape=jax.ShapeDtypeStruct((G, 1, lanes), jnp.float32),
        grid=(G,),
        in_specs=[
            pl.BlockSpec(memory_space=pltpu.MemorySpace.SMEM),     # b2 scalar (1,)
            pl.BlockSpec((1, KR, lanes), lambda g: (g, 0, 0)),     # im2col + ones row
            pl.BlockSpec((OUT_CH, KR), lambda g: (0, 0)),          # [W1 | b1]   bf16
            pl.BlockSpec((K2, OUT_CH), lambda g: (0, 0)),          # W2 taps     bf16
            pl.BlockSpec((KSIZE, lanes), lambda g: (0, 0)),        # dh validity mask
            pl.BlockSpec((KSIZE, lanes), lambda g: (0, 0)),        # dw validity mask
        ],
        out_specs=pl.BlockSpec((1, 1, lanes), lambda g: (g, 0, 0)),
        compiler_params=pltpu.CompilerParams(
            dimension_semantics=("parallel",),                     # shards over v7x TCs
            vmem_limit_bytes=32 * 1024 * 1024),
    )(b2, pat, w1m_bf, w2m_bf, vh, vw)


# ------------------------------- plain-JAX glue ---------------------------------

def im2col_taps(x, k):
    """x: (B, H, W) -> (B, k*k, H*W) with taps ordered kh-outer / kw-inner."""
    B, H, W = x.shape
    p = k // 2
    xp = jnp.pad(x, ((0, 0), (p, p), (p, p)))
    cols = [xp[:, kh:kh + H, kw:kw + W] for kh in range(k) for kw in range(k)]
    return jnp.stack(cols, axis=1).reshape(B, k * k, H * W)


def make_tap_masks(H, W, lanes):
    """Conv2 boundary-validity masks, (5, lanes) each; depend only on q mod H*W."""
    q = jnp.arange(lanes, dtype=jnp.int32) % (H * W)
    hh = q // W
    ww = q % W
    r = KSIZE // 2
    vh = jnp.stack([((hh + (kh - r) >= 0) & (hh + (kh - r) < H)) for kh in range(KSIZE)])
    vw = jnp.stack([((ww + (kw - r) >= 0) & (ww + (kw - r) < W)) for kw in range(KSIZE)])
    return vh.astype(jnp.float32), vw.astype(jnp.float32)


def denoiser(x_img, u, w1m_bf, w2m_bf, b2, vh, vw):
    """AdditionalLayer + conv1 -> ReLU -> conv2 -> MinusLayer on complex fields."""
    N, _, H, W = x_img.shape
    HW = H * W
    B2 = 2 * N
    P = PLANES_PER_STEP if B2 % PLANES_PER_STEP == 0 else 1
    G = B2 // P
    c1 = x_img + u                                     # AdditionalLayer (u == 0 first time)
    planes = jnp.concatenate([jnp.real(c1), jnp.imag(c1)],
                             axis=0).reshape(B2, H, W).astype(jnp.float32)
    pat = im2col_taps(planes, KSIZE)                   # (B2, 25, HW)
    ones = jnp.ones((B2, 1, HW), jnp.float32)          # bias row: folds b1 into W1 matmul
    pat = jnp.concatenate([pat, ones], axis=1)         # (B2, 26, HW)
    # pack P planes along the lane axis per grid step: (G, 26, P*HW)
    pat = pat.reshape(G, P, K2 + 1, HW).transpose(0, 2, 1, 3).reshape(G, K2 + 1, P * HW)
    z = fused_denoiser_call(pat, b2, w1m_bf, w2m_bf, vh, vw, H, W)   # (G, 1, P*HW)
    z = z.reshape(B2, H, W)
    zr = z[:N].reshape(N, 1, H, W)
    zi = z[N:].reshape(N, 1, H, W)
    return lax.complex(zr, zi)


def admm_csnet_forward(x, mask, w1m_bf, w2m_bf, b2, rho, gamma):
    """x: (N,1,H,W) complex64, mask: (H,W) f32.  Mirrors ADMMCSNetLayer.forward."""
    # TODO(synk): fft2/ifft2 have no Pallas TPU equivalent; they and the tiny ADMM
    # scalar updates stay in plain JAX (XLA fuses them around the FFTs).
    N, _, H, W = x.shape
    B2 = 2 * N
    P = PLANES_PER_STEP if B2 % PLANES_PER_STEP == 0 else 1
    vh, vw = make_tap_masks(H, W, P * H * W)

    y = x * mask                                              # k-space measurements
    denom = mask + rho

    # ReconstructionOriginalLayer
    x_img = jnp.fft.ifft2(y / denom)
    u = jnp.zeros_like(x_img)

    # conv1 -> nonlinear -> conv2 -> minus   (fused Pallas kernel)
    z = denoiser(x_img, u, w1m_bf, w2m_bf, b2, vh, vw)
    # MultipleOriginalLayer: u = gamma * (x - z)   (u == 0 here)
    u = u + gamma * (x_img - z)

    for _ in range(NUM_STAGES):
        # ReconstructionUpdateLayer
        x_img = jnp.fft.ifft2((y + rho * jnp.fft.fft2(z - u)) / denom)
        # AdditionalLayer is folded into the denoiser prologue (x + u)
        z = denoiser(x_img, u, w1m_bf, w2m_bf, b2, vh, vw)
        # MultipleUpdateLayer
        u = u + gamma * (x_img - z)

    # ReconstructionFinalLayer
    x_final = jnp.fft.ifft2((y + rho * jnp.fft.fft2(z - u)) / denom)

    # outer data consistency: ifft2(y + (1 - mask) * fft2(x_final))
    return jnp.fft.ifft2(y + (1.0 - mask) * jnp.fft.fft2(x_final))


# ------------------------------------ main ---------------------------------------

if __name__ == "__main__":
    key = jax.random.PRNGKey(0)
    k_w1, k_w2, k_b1, k_b2, k_xr, k_xi, k_m = jax.random.split(key, 7)

    N, H, W = 2, 16, 16

    # Parameter init mirrors reset_parameters (normal * 0.025); biases default-small.
    w1 = jax.random.normal(k_w1, (OUT_CH, IN_CH, KSIZE, KSIZE), jnp.float32) * 0.025
    w2 = jax.random.normal(k_w2, (IN_CH, OUT_CH, KSIZE, KSIZE), jnp.float32) * 0.025
    b1 = jax.random.normal(k_b1, (OUT_CH,), jnp.float32) * 0.01
    b2 = jax.random.normal(k_b2, (IN_CH,), jnp.float32) * 0.01

    # Matmul-form weights: bf16 MXU operands; b1 folded in as an extra W1 column.
    w1m_bf = jnp.concatenate([w1.reshape(OUT_CH, K2), b1.reshape(OUT_CH, 1)],
                             axis=1).astype(jnp.bfloat16)            # (128, 26)
    w2m_bf = w2.reshape(OUT_CH, K2).T.astype(jnp.bfloat16)           # (25, 128)

    # k-space undersampling mask and complex input (N, 1, H, W)
    mask = (jax.random.uniform(k_m, (H, W)) < 0.4).astype(jnp.float32)
    xr = jax.random.normal(k_xr, (N, 1, H, W), jnp.float32)
    xi = jax.random.normal(k_xi, (N, 1, H, W), jnp.float32)
    x = (xr + 1j * xi).astype(jnp.complex64)

    rho = jnp.float32(0.1)     # nn.Parameter init value
    gamma = jnp.float32(1.0)   # nn.Parameter init value

    # ---- correctness spot-check of the fused denoiser vs a plain-JAX conv reference ----
    B2 = 2 * N
    P = PLANES_PER_STEP if B2 % PLANES_PER_STEP == 0 else 1
    vh, vw = make_tap_masks(H, W, P * H * W)
    y0 = x * mask
    x_img0 = jnp.fft.ifft2(y0 / (mask + rho))
    u0 = jnp.zeros_like(x_img0)
    z_pallas = denoiser(x_img0, u0, w1m_bf, w2m_bf, b2, vh, vw)

    def denoiser_ref(x_img, u):
        c1 = x_img + u

        def branch(p):
            f = lax.conv_general_dilated(p, w1, (1, 1), "SAME",
                                         dimension_numbers=("NCHW", "OIHW", "NCHW"),
                                         precision=lax.Precision.HIGHEST)
            f = jnp.maximum(f + b1[None, :, None, None], 0.0)
            g = lax.conv_general_dilated(f, w2, (1, 1), "SAME",
                                         dimension_numbers=("NCHW", "OIHW", "NCHW"),
                                         precision=lax.Precision.HIGHEST)
            return p - (g + b2[None, :, None, None])

        return lax.complex(branch(jnp.real(c1)), branch(jnp.imag(c1)))

    z_ref = denoiser_ref(x_img0, u0)
    err = float(jnp.max(jnp.abs(z_pallas - z_ref)))
    assert err < 5e-3, f"fused denoiser mismatch vs conv reference: max |err| = {err}"

    fwd = jax.jit(admm_csnet_forward)
    out = fwd(x, mask, w1m_bf, w2m_bf, b2, rho, gamma)
    jax.block_until_ready(out)
    assert out.shape == (N, 1, H, W) and out.dtype == jnp.complex64
    print("KERNEL_OK")
</pallas_src>

<mosaic_0001>
module attributes {stable_mosaic.version = 11 : i64} {
  func.func @_denoiser_kernel(%arg0: i32, %arg1: memref<1xf32, #tpu.memory_space<smem>>, %arg2: memref<1x26x512xf32, #tpu.memory_space<vmem>>, %arg3: memref<128x26xbf16, #tpu.memory_space<vmem>>, %arg4: memref<25x128xbf16, #tpu.memory_space<vmem>>, %arg5: memref<5x512xf32, #tpu.memory_space<vmem>>, %arg6: memref<5x512xf32, #tpu.memory_space<vmem>>, %arg7: memref<1x1x512xf32, #tpu.memory_space<vmem>>) attributes {dimension_semantics = [#tpu.dimension_semantics<parallel>], iteration_bounds = array<i64: 2>, scalar_prefetch = 0 : i64, scratch_operands = 0 : i64, tpu.core_type = #tpu.core_type<tc>, window_params = [{transform_indices = @transform_0, window_bounds = array<i64: 1>}, {transform_indices = @transform_1, window_bounds = array<i64: 1, 26, 512>}, {pipeline_mode = #tpu.pipeline_mode<synchronous>, transform_indices = @transform_2, window_bounds = array<i64: 128, 26>}, {pipeline_mode = #tpu.pipeline_mode<synchronous>, transform_indices = @transform_3, window_bounds = array<i64: 25, 128>}, {pipeline_mode = #tpu.pipeline_mode<synchronous>, transform_indices = @transform_4, window_bounds = array<i64: 5, 512>}, {pipeline_mode = #tpu.pipeline_mode<synchronous>, transform_indices = @transform_5, window_bounds = array<i64: 5, 512>}, {transform_indices = @transform_6, window_bounds = array<i64: 1, 1, 512>}]} {
    %c0 = arith.constant 0 : index
    %c0_0 = arith.constant 0 : index
    %c0_1 = arith.constant 0 : index
    %0 = vector.load %arg2[%c0, %c0_0, %c0_1] : memref<1x26x512xf32, #tpu.memory_space<vmem>>, vector<1x26x512xf32>
    %1 = vector.shape_cast %0 : vector<1x26x512xf32> to vector<26x512xf32>
    %c0_2 = arith.constant 0 : index
    %c0_3 = arith.constant 0 : index
    %2 = vector.load %arg3[%c0_2, %c0_3] : memref<128x26xbf16, #tpu.memory_space<vmem>>, vector<128x26xbf16>
    %3 = arith.truncf %1 : vector<26x512xf32> to vector<26x512xbf16>
    %cst = arith.constant dense<0.000000e+00> : vector<128x512xf32>
    %4 = tpu.matmul %2, %3, %cst {dimension_numbers = #tpu.dot_dimension_numbers<[1], [0], [0], [1], [0, 0, 1, 1], [], []>} : vector<128x26xbf16>, vector<26x512xbf16>, vector<128x512xf32> -> vector<128x512xf32>
    %cst_4 = arith.constant 0.000000e+00 : f32
    %5 = vector.broadcast %cst_4 : f32 to vector<128x512xf32>
    %6 = arith.maximumf %4, %5 : vector<128x512xf32>
    %c0_5 = arith.constant 0 : index
    %c0_6 = arith.constant 0 : index
    %7 = vector.load %arg4[%c0_5, %c0_6] : memref<25x128xbf16, #tpu.memory_space<vmem>>, vector<25x128xbf16>
    %8 = arith.truncf %6 : vector<128x512xf32> to vector<128x512xbf16>
    %cst_7 = arith.constant dense<0.000000e+00> : vector<25x512xf32>
    %9 = tpu.matmul %7, %8, %cst_7 {dimension_numbers = #tpu.dot_dimension_numbers<[1], [0], [0], [1], [0, 0, 1, 1], [], []>} : vector<25x128xbf16>, vector<128x512xbf16>, vector<25x512xf32> -> vector<25x512xf32>
    %10 = vector.extract_strided_slice %9 {offsets = [0, 0], sizes = [5, 512], strides = [1, 1]} : vector<25x512xf32> to vector<5x512xf32>
    %c32_i32 = arith.constant 32 : i32
    %11 = tpu.dynamic_rotate %10 by %c32_i32 dim 1 : vector<5x512xf32>, i32 -> vector<5x512xf32>
    %c0_8 = arith.constant 0 : index
    %c0_9 = arith.constant 0 : index
    %12 = vector.load %arg5[%c0_8, %c0_9] : memref<5x512xf32, #tpu.memory_space<vmem>>, vector<1x512xf32>
    %13 = vector.broadcast %12 : vector<1x512xf32> to vector<5x512xf32>
    %14 = arith.mulf %11, %13 : vector<5x512xf32>
    %15 = vector.extract_strided_slice %9 {offsets = [5, 0], sizes = [5, 512], strides = [1, 1]} : vector<25x512xf32> to vector<5x512xf32>
    %c16_i32 = arith.constant 16 : i32
    %16 = tpu.dynamic_rotate %15 by %c16_i32 dim 1 : vector<5x512xf32>, i32 -> vector<5x512xf32>
    %c1 = arith.constant 1 : index
    %c0_10 = arith.constant 0 : index
    %17 = vector.load %arg5[%c1, %c0_10] : memref<5x512xf32, #tpu.memory_space<vmem>>, vector<1x512xf32>
    %18 = vector.broadcast %17 : vector<1x512xf32> to vector<5x512xf32>
    %19 = arith.mulf %16, %18 : vector<5x512xf32>
    %20 = vector.extract_strided_slice %9 {offsets = [10, 0], sizes = [5, 512], strides = [1, 1]} : vector<25x512xf32> to vector<5x512xf32>
    %c2 = arith.constant 2 : index
    %c0_11 = arith.constant 0 : index
    %21 = vector.load %arg5[%c2, %c0_11] : memref<5x512xf32, #tpu.memory_space<vmem>>, vector<1x512xf32>
    %22 = vector.broadcast %21 : vector<1x512xf32> to vector<5x512xf32>
    %23 = arith.mulf %20, %22 : vector<5x512xf32>
    %24 = vector.extract_strided_slice %9 {offsets = [15, 0], sizes = [5, 512], strides = [1, 1]} : vector<25x512xf32> to vector<5x512xf32>
    %c496_i32 = arith.constant 496 : i32
    %25 = tpu.dynamic_rotate %24 by %c496_i32 dim 1 : vector<5x512xf32>, i32 -> vector<5x512xf32>
    %c3 = arith.constant 3 : index
    %c0_12 = arith.constant 0 : index
    %26 = vector.load %arg5[%c3, %c0_12] : memref<5x512xf32, #tpu.memory_space<vmem>>, vector<1x512xf32>
    %27 = vector.broadcast %26 : vector<1x512xf32> to vector<5x512xf32>
    %28 = arith.mulf %25, %27 : vector<5x512xf32>
    %29 = vector.extract_strided_slice %9 {offsets = [20, 0], sizes = [5, 512], strides = [1, 1]} : vector<25x512xf32> to vector<5x512xf32>
    %c480_i32 = arith.constant 480 : i32
    %30 = tpu.dynamic_rotate %29 by %c480_i32 dim 1 : vector<5x512xf32>, i32 -> vector<5x512xf32>
    %c4 = arith.constant 4 : index
    %c0_13 = arith.constant 0 : index
    %31 = vector.load %arg5[%c4, %c0_13] : memref<5x512xf32, #tpu.memory_space<vmem>>, vector<1x512xf32>
    %32 = vector.broadcast %31 : vector<1x512xf32> to vector<5x512xf32>
    %33 = arith.mulf %30, %32 : vector<5x512xf32>
    %34 = arith.addf %14, %19 : vector<5x512xf32>
    %35 = arith.addf %23, %28 : vector<5x512xf32>
    %36 = arith.addf %34, %35 : vector<5x512xf32>
    %37 = arith.addf %36, %33 : vector<5x512xf32>
    %38 = vector.extract_strided_slice %37 {offsets = [0, 0], sizes = [1, 512], strides = [1, 1]} : vector<5x512xf32> to vector<1x512xf32>
    %c2_i32 = arith.constant 2 : i32
    %39 = tpu.dynamic_rotate %38 by %c2_i32 dim 1 : vector<1x512xf32>, i32 -> vector<1x512xf32>
    %c0_14 = arith.constant 0 : index
    %c0_15 = arith.constant 0 : index
    %40 = vector.load %arg6[%c0_14, %c0_15] : memref<5x512xf32, #tpu.memory_space<vmem>>, vector<1x512xf32>
    %41 = arith.mulf %39, %40 : vector<1x512xf32>
    %42 = vector.extract_strided_slice %37 {offsets = [1, 0], sizes = [1, 512], strides = [1, 1]} : vector<5x512xf32> to vector<1x512xf32>
    %c1_i32 = arith.constant 1 : i32
    %43 = tpu.dynamic_rotate %42 by %c1_i32 dim 1 : vector<1x512xf32>, i32 -> vector<1x512xf32>
    %c1_16 = arith.constant 1 : index
    %c0_17 = arith.constant 0 : index
    %44 = vector.load %arg6[%c1_16, %c0_17] : memref<5x512xf32, #tpu.memory_space<vmem>>, vector<1x512xf32>
    %45 = arith.mulf %43, %44 : vector<1x512xf32>
    %46 = vector.extract_strided_slice %37 {offsets = [2, 0], sizes = [1, 512], strides = [1, 1]} : vector<5x512xf32> to vector<1x512xf32>
    %c2_18 = arith.constant 2 : index
    %c0_19 = arith.constant 0 : index
    %47 = vector.load %arg6[%c2_18, %c0_19] : memref<5x512xf32, #tpu.memory_space<vmem>>, vector<1x512xf32>
    %48 = arith.mulf %46, %47 : vector<1x512xf32>
    %49 = vector.extract_strided_slice %37 {offsets = [3, 0], sizes = [1, 512], strides = [1, 1]} : vector<5x512xf32> to vector<1x512xf32>
    %c511_i32 = arith.constant 511 : i32
    %50 = tpu.dynamic_rotate %49 by %c511_i32 dim 1 : vector<1x512xf32>, i32 -> vector<1x512xf32>
    %c3_20 = arith.constant 3 : index
    %c0_21 = arith.constant 0 : index
    %51 = vector.load %arg6[%c3_20, %c0_21] : memref<5x512xf32, #tpu.memory_space<vmem>>, vector<1x512xf32>
    %52 = arith.mulf %50, %51 : vector<1x512xf32>
    %53 = vector.extract_strided_slice %37 {offsets = [4, 0], sizes = [1, 512], strides = [1, 1]} : vector<5x512xf32> to vector<1x512xf32>
    %c510_i32 = arith.constant 510 : i32
    %54 = tpu.dynamic_rotate %53 by %c510_i32 dim 1 : vector<1x512xf32>, i32 -> vector<1x512xf32>
    %c4_22 = arith.constant 4 : index
    %c0_23 = arith.constant 0 : index
    %55 = vector.load %arg6[%c4_22, %c0_23] : memref<5x512xf32, #tpu.memory_space<vmem>>, vector<1x512xf32>
    %56 = arith.mulf %54, %55 : vector<1x512xf32>
    %57 = arith.addf %41, %45 : vector<1x512xf32>
    %58 = arith.addf %48, %52 : vector<1x512xf32>
    %59 = arith.addf %57, %58 : vector<1x512xf32>
    %60 = arith.addf %59, %56 : vector<1x512xf32>
    %c0_24 = arith.constant 0 : index
    %c12 = arith.constant 12 : index
    %c0_25 = arith.constant 0 : index
    %61 = vector.load %arg2[%c0_24, %c12, %c0_25] : memref<1x26x512xf32, #tpu.memory_space<vmem>>, vector<1x1x512xf32>
    %62 = vector.shape_cast %61 : vector<1x1x512xf32> to vector<1x512xf32>
    %63 = arith.subf %62, %60 : vector<1x512xf32>
    %c0_26 = arith.constant 0 : index
    %64 = memref.load %arg1[%c0_26] : memref<1xf32, #tpu.memory_space<smem>>
    %65 = vector.broadcast %64 : f32 to vector<1x512xf32>
    %66 = arith.subf %63, %65 : vector<1x512xf32>
    %c0_27 = arith.constant 0 : index
    %c0_28 = arith.constant 0 : index
    %c0_29 = arith.constant 0 : index
    %67 = vector.load %arg7[%c0_27, %c0_28, %c0_29] : memref<1x1x512xf32, #tpu.memory_space<vmem>>, vector<1x1x512xf32>
    %68 = vector.shape_cast %67 : vector<1x1x512xf32> to vector<1x512xf32>
    %69 = vector.shape_cast %66 : vector<1x512xf32> to vector<1x1x512xf32>
    tpu.vector_store %arg7[%c0_27, %c0_28, %c0_29], %69 {strides = array<i32>} : memref<1x1x512xf32, #tpu.memory_space<vmem>>, vector<1x1x512xf32>,
    return
  }
  func.func @transform_0(%arg0: i32) -> i32 {
    %c0_i32 = arith.constant 0 : i32
    %c0_i32_0 = arith.constant 0 : i32
    return %c0_i32 : i32
  }
  func.func @transform_1(%arg0: i32) -> (i32, i32, i32) {
    %c0_i32 = arith.constant 0 : i32
    %c0_i32_0 = arith.constant 0 : i32
    %c0_i32_1 = arith.constant 0 : i32
    return %arg0, %c0_i32, %c0_i32_0 : i32, i32, i32
  }
  func.func @transform_2(%arg0: i32) -> (i32, i32) {
    %c0_i32 = arith.constant 0 : i32
    %c0_i32_0 = arith.constant 0 : i32
    %c0_i32_1 = arith.constant 0 : i32
    return %c0_i32, %c0_i32_0 : i32, i32
  }
  func.func @transform_3(%arg0: i32) -> (i32, i32) {
    %c0_i32 = arith.constant 0 : i32
    %c0_i32_0 = arith.constant 0 : i32
    %c0_i32_1 = arith.constant 0 : i32
    return %c0_i32, %c0_i32_0 : i32, i32
  }
  func.func @transform_4(%arg0: i32) -> (i32, i32) {
    %c0_i32 = arith.constant 0 : i32
    %c0_i32_0 = arith.constant 0 : i32
    %c0_i32_1 = arith.constant 0 : i32
    return %c0_i32, %c0_i32_0 : i32, i32
  }
  func.func @transform_5(%arg0: i32) -> (i32, i32) {
    %c0_i32 = arith.constant 0 : i32
    %c0_i32_0 = arith.constant 0 : i32
    %c0_i32_1 = arith.constant 0 : i32
    return %c0_i32, %c0_i32_0 : i32, i32
  }
  func.func @transform_6(%arg0: i32) -> (i32, i32, i32) {
    %c0_i32 = arith.constant 0 : i32
    %c0_i32_0 = arith.constant 0 : i32
    %c0_i32_1 = arith.constant 0 : i32
    return %arg0, %c0_i32, %c0_i32_0 : i32, i32, i32
  }
}

</mosaic_0001>

<llo_original>
// kernel: tpu_custom_call.1
$region0: #{tpu_custom_call.1}
  #allocation0 [shape = 'u32[]', space=smem, size = 0x4, offset = 0x4, fixed_abs, tag = 'smem constant byte address 0x4 - core index']
  #allocation1 [shape = 'u32[144,128]{1,0:T(1,128)}', space=vmem, size = 0x12000, scoped, tag = 'internal scratch']
  #allocation2 [shape = 'f32[1]{0:T(128)S(6)}', space=smem, size = 0x200, scoped, tag = 'scoped memory for tpu_custom_call.1']
  %s0 = inlined_call_operand.<no memory space> [shape: f32[1], index: 0, kind: input, shape index: {}]
  %s1 = inlined_call_operand.vmem [shape: f32[2,26,512], index: 1, kind: input, shape index: {}]
  %s2 = inlined_call_operand.vmem [shape: bf16[128,26], index: 2, kind: input, shape index: {}]
  %s3 = inlined_call_operand.vmem [shape: bf16[25,128], index: 3, kind: input, shape index: {}]
  %s4 = inlined_call_operand.vmem [shape: f32[5,512], index: 4, kind: input, shape index: {}]
  %s5 = inlined_call_operand.vmem [shape: f32[5,512], index: 5, kind: input, shape index: {}]
  %s6 = inlined_call_operand.hbm [shape: f32[2,1,512], index: 6, kind: output, shape index: {}]
  %s7 = sld [smem:[#allocation0]]
  $region57: #{tpu_custom_call.1} parent=0
    _
  %s9 = ssub.s32 1, %s7
  %s10 = scalar_select 0, %s9, %s7
  %11 = sst [smem:[#allocation2]] %s0
  $region1: #{tpu_custom_call.1} parent=0
    #allocation3 [shape = 'u8[4096]{0}', space=vmem, size = 0x1000, scoped, tag = 'output window, operand 0']
    #allocation4 [shape = 's32[2]{0}', space=sflag, size = 0x8, scoped, tag = 'scoped memory for tpu_custom_call.1']
    %12 = vsyncpa [#allocation4], 0
    %s13 = scalar_lea.sflag [#allocation4], 1
    %14 = vsyncpa %s13, 0
    loop: start=0, step=1, limit=4
    $region2: #{tpu_custom_call.1} parent=1 // loop_pre_header
      _
    $region3: #{tpu_custom_call.1} parent=1 // loop_header
      %s16 = sphi 0, %s20
      %p17 = scmp.ge.s32.totalorder %s16, 4
      %s24 = sphi 0, %s24
      %s26 = sphi 0, %s24
      %s27 = sphi 0, %s26
      %s41 = sphi 0, %s27
      %s47 = sphi 0, %s49
      %s50 = sphi 0, %s47
      %s51 = sphi 0, %s50
      %s67 = sphi 0, %s51
      %s71 = sphi 0, %s71
      %s73 = sphi 0, %s71
      %s74 = sphi 0, %s73
      %s88 = sphi 0, %s74
      %s92 = sphi 0, %s92
      %s94 = sphi 0, %s92
      %s95 = sphi 0, %s94
      %s109 = sphi 0, %s95
      %s113 = sphi 0, %s113
      %s115 = sphi 0, %s113
      %s116 = sphi 0, %s115
      %s130 = sphi 0, %s116
      %s134 = sphi 0, %s134
      %s136 = sphi 0, %s134
      %s137 = sphi 0, %s136
      %s151 = sphi 0, %s137
      %s157 = sphi 0, %s159
      %s160 = sphi 0, %s157
      %s161 = sphi 0, %s160
      %s177 = sphi 0, %s161
    $region4: #{tpu_custom_call.1} parent=1 // loop_header_branch
      %19 = sbr.rel (%p17) target = $region8
    $region5: #{tpu_custom_call.1} parent=1 // loop_body
      %s21 = ssub.s32 %s16, 1
      %s22 = ssub.s32 %s16, 2
      %s23 = sadd.s32 %s16, 1
      %s25 = sadd.s32 %s24, 1
      %p28 = scmp.eq.s32.totalorder %s16, 1
      %p29 = scmp.ne.s32.totalorder %s24, %s26
      %p30 = scmp.eq.s32.totalorder %s16, 0
      %p31 = por %p29, %p30
      %p32 = scmp.ne.s32.totalorder %s24, %s26
      %p33 = scmp.eq.s32.totalorder %s21, 1
      %p34 = por %p32, %p33
      %p35 = scmp.ne.s32.totalorder %s26, %s27
      %p36 = scmp.eq.s32.totalorder %s21, 0
      %p37 = por %p35, %p36
      %p38 = scmp.ne.s32.totalorder %s26, %s27
      %p39 = scmp.eq.s32.totalorder %s22, 1
      %p40 = por %p38, %p39
      %p42 = scmp.ne.s32.totalorder %s27, %s41
      %p43 = scmp.eq.s32.totalorder %s22, 0
      %p44 = por %p42, %p43
      %s45 = ssub.s32 %s16, %s23
      %p46 = scmp.eq.s32.totalorder %s45, 0
      %s48 = sadd.s32 %s47, 1
      %s49 = scalar_select %p46, %s47, %s48
      %p52 = pneg %p46
      %p53 = scmp.eq.s32.totalorder %s16, 1
      %p54 = por %p52, %p53
      %p55 = scmp.ne.s32.totalorder %s47, %s50
      %p56 = scmp.eq.s32.totalorder %s16, 0
      %p57 = por %p55, %p56
      %p58 = scmp.ne.s32.totalorder %s47, %s50
      %p59 = scmp.eq.s32.totalorder %s21, 1
      %p60 = por %p58, %p59
      %p61 = scmp.ne.s32.totalorder %s50, %s51
      %p62 = scmp.eq.s32.totalorder %s21, 0
      %p63 = por %p61, %p62
      %p64 = scmp.ne.s32.totalorder %s50, %s51
      %p65 = scmp.eq.s32.totalorder %s22, 1
      %p66 = por %p64, %p65
      %p68 = scmp.ne.s32.totalorder %s51, %s67
      %p69 = scmp.eq.s32.totalorder %s22, 0
      %p70 = por %p68, %p69
      %s72 = sadd.s32 %s71, 1
      %p75 = scmp.eq.s32.totalorder %s16, 1
      %p76 = scmp.ne.s32.totalorder %s71, %s73
      %p77 = scmp.eq.s32.totalorder %s16, 0
      %p78 = por %p76, %p77
      %p79 = scmp.ne.s32.totalorder %s71, %s73
      %p80 = scmp.eq.s32.totalorder %s21, 1
      %p81 = por %p79, %p80
      %p82 = scmp.ne.s32.totalorder %s73, %s74
      %p83 = scmp.eq.s32.totalorder %s21, 0
      %p84 = por %p82, %p83
      %p85 = scmp.ne.s32.totalorder %s73, %s74
      %p86 = scmp.eq.s32.totalorder %s22, 1
      %p87 = por %p85, %p86
      %p89 = scmp.ne.s32.totalorder %s74, %s88
      %p90 = scmp.eq.s32.totalorder %s22, 0
      %p91 = por %p89, %p90
      %s93 = sadd.s32 %s92, 1
      %p96 = scmp.eq.s32.totalorder %s16, 1
      %p97 = scmp.ne.s32.totalorder %s92, %s94
      %p98 = scmp.eq.s32.totalorder %s16, 0
      %p99 = por %p97, %p98
      %p100 = scmp.ne.s32.totalorder %s92, %s94
      %p101 = scmp.eq.s32.totalorder %s21, 1
      %p102 = por %p100, %p101
      %p103 = scmp.ne.s32.totalorder %s94, %s95
      %p104 = scmp.eq.s32.totalorder %s21, 0
      %p105 = por %p103, %p104
      %p106 = scmp.ne.s32.totalorder %s94, %s95
      %p107 = scmp.eq.s32.totalorder %s22, 1
      %p108 = por %p106, %p107
      %p110 = scmp.ne.s32.totalorder %s95, %s109
      %p111 = scmp.eq.s32.totalorder %s22, 0
      %p112 = por %p110, %p111
      %s114 = sadd.s32 %s113, 1
      %p117 = scmp.eq.s32.totalorder %s16, 1
      %p118 = scmp.ne.s32.totalorder %s113, %s115
      %p119 = scmp.eq.s32.totalorder %s16, 0
      %p120 = por %p118, %p119
      %p121 = scmp.ne.s32.totalorder %s113, %s115
      %p122 = scmp.eq.s32.totalorder %s21, 1
      %p123 = por %p121, %p122
      %p124 = scmp.ne.s32.totalorder %s115, %s116
      %p125 = scmp.eq.s32.totalorder %s21, 0
      %p126 = por %p124, %p125
      %p127 = scmp.ne.s32.totalorder %s115, %s116
      %p128 = scmp.eq.s32.totalorder %s22, 1
      %p129 = por %p127, %p128
      %p131 = scmp.ne.s32.totalorder %s116, %s130
      %p132 = scmp.eq.s32.totalorder %s22, 0
      %p133 = por %p131, %p132
      %s135 = sadd.s32 %s134, 1
      %p138 = scmp.eq.s32.totalorder %s16, 1
      %p139 = scmp.ne.s32.totalorder %s134, %s136
      %p140 = scmp.eq.s32.totalorder %s16, 0
      %p141 = por %p139, %p140
      %p142 = scmp.ne.s32.totalorder %s134, %s136
      %p143 = scmp.eq.s32.totalorder %s21, 1
      %p144 = por %p142, %p143
      %p145 = scmp.ne.s32.totalorder %s136, %s137
      %p146 = scmp.eq.s32.totalorder %s21, 0
      %p147 = por %p145, %p146
      %p148 = scmp.ne.s32.totalorder %s136, %s137
      %p149 = scmp.eq.s32.totalorder %s22, 1
      %p150 = por %p148, %p149
      %p152 = scmp.ne.s32.totalorder %s137, %s151
      %p153 = scmp.eq.s32.totalorder %s22, 0
      %p154 = por %p152, %p153
      %s155 = ssub.s32 %s16, %s23
      %p156 = scmp.eq.s32.totalorder %s155, 0
      %s158 = sadd.s32 %s157, 1
      %s159 = scalar_select %p156, %s157, %s158
      %p162 = pneg %p156
      %p163 = scmp.eq.s32.totalorder %s16, 1
      %p164 = por %p162, %p163
      %p165 = scmp.ne.s32.totalorder %s157, %s160
      %p166 = scmp.eq.s32.totalorder %s16, 0
      %p167 = por %p165, %p166
      %p168 = scmp.ne.s32.totalorder %s157, %s160
      %p169 = scmp.eq.s32.totalorder %s21, 1
      %p170 = por %p168, %p169
      %p171 = scmp.ne.s32.totalorder %s160, %s161
      %p172 = scmp.eq.s32.totalorder %s21, 0
      %p173 = por %p171, %p172
      %p174 = scmp.ne.s32.totalorder %s160, %s161
      %p175 = scmp.eq.s32.totalorder %s22, 1
      %p176 = por %p174, %p175
      %p178 = scmp.ne.s32.totalorder %s161, %s177
      %p179 = scmp.eq.s32.totalorder %s22, 0
      %p180 = por %p178, %p179
      %p181 = scmp.le.s32.totalorder 1, %s16
      %p182 = scmp.lt.s32.totalorder %s16, 3
      %p183 = pnand %p181, %p182
      %p184 = pneg %p183
      // Predicated region
      $region9: #{tpu_custom_call.1} parent=5 // pred_check
        _
      $region10: #{tpu_custom_call.1} parent=5 // pred_check_branch
        %186 = sbr.rel (%p183) target = $region12
      $region11: #{tpu_custom_call.1} parent=5 // pred_region
        %s187 = ssub.s32 %s16, 1
        // Predicated region
        $region13: #{tpu_custom_call.1} parent=11 // pred_check
          %p188 = pneg %p37
        $region14: #{tpu_custom_call.1} parent=11 // pred_check_branch
          %190 = sbr.rel (%p188) target = $region16
        $region15: #{tpu_custom_call.1} parent=11 // pred_region
          _
        $region16: #{tpu_custom_call.1} parent=11 // pred_fallthru
          _
        // Predicated region
        $region17: #{tpu_custom_call.1} parent=11 // pred_check
          %p191 = pneg %p84
        $region18: #{tpu_custom_call.1} parent=11 // pred_check_branch
          %193 = sbr.rel (%p191) target = $region20
        $region19: #{tpu_custom_call.1} parent=11 // pred_region
          _
        $region20: #{tpu_custom_call.1} parent=11 // pred_fallthru
          _
        // Predicated region
        $region21: #{tpu_custom_call.1} parent=11 // pred_check
          %p194 = pneg %p105
        $region22: #{tpu_custom_call.1} parent=11 // pred_check_branch
          %196 = sbr.rel (%p194) target = $region24
        $region23: #{tpu_custom_call.1} parent=11 // pred_region
          _
        $region24: #{tpu_custom_call.1} parent=11 // pred_fallthru
          _
        // Predicated region
        $region25: #{tpu_custom_call.1} parent=11 // pred_check
          %p197 = pneg %p126
        $region26: #{tpu_custom_call.1} parent=11 // pred_check_branch
          %199 = sbr.rel (%p197) target = $region28
        $region27: #{tpu_custom_call.1} parent=11 // pred_region
          _
        $region28: #{tpu_custom_call.1} parent=11 // pred_fallthru
          _
        // Predicated region
        $region29: #{tpu_custom_call.1} parent=11 // pred_check
          %p200 = pneg %p147
        $region30: #{tpu_custom_call.1} parent=11 // pred_check_branch
          %202 = sbr.rel (%p200) target = $region32
        $region31: #{tpu_custom_call.1} parent=11 // pred_region
          _
        $region32: #{tpu_custom_call.1} parent=11 // pred_fallthru
          _
      $region12: #{tpu_custom_call.1} parent=5 // pred_fallthru
        _
      %p203 = scmp.lt.s32.totalorder %s16, 2
      // Predicated region
      $region33: #{tpu_custom_call.1} parent=5 // pred_check
        %p204 = pneg %p203
      $region34: #{tpu_custom_call.1} parent=5 // pred_check_branch
        %206 = sbr.rel (%p204) target = $region36
      $region35: #{tpu_custom_call.1} parent=5 // pred_region
        // Predicated region
        $region37: #{tpu_custom_call.1} parent=35 // pred_check
          %p207 = pneg %p57
        $region38: #{tpu_custom_call.1} parent=35 // pred_check_branch
          %209 = sbr.rel (%p207) target = $region40
        $region39: #{tpu_custom_call.1} parent=35 // pred_region
          %p210 = scmp.lt.s32.totalorder %s16, 1
          %s211 = scalar_select %p210, %s16, 1
          %s212 = smul.addr %s211, 16
          %s213 = smul.addr %s212, 8
          %s214 = scalar_lea.vmem %s1, %s213
        $region40: #{tpu_custom_call.1} parent=35 // pred_fallthru
          _
      $region36: #{tpu_custom_call.1} parent=5 // pred_fallthru
        _
      %p215 = scmp.le.s32.totalorder 1, %s16
      %p216 = scmp.lt.s32.totalorder %s16, 3
      %p217 = pnand %p215, %p216
      %p218 = pneg %p217
      // Predicated region
      $region41: #{tpu_custom_call.1} parent=5 // pred_check
        _
      $region42: #{tpu_custom_call.1} parent=5 // pred_check_branch
        %220 = sbr.rel (%p217) target = $region44
      $region43: #{tpu_custom_call.1} parent=5 // pred_region
        %s221 = ssub.s32 %s16, 1
        %p222 = pneg %p37
        %p223 = pneg %p34
        %p224 = scmp.lt.s32.totalorder %s21, 1
        %s225 = scalar_select %p224, %s21, 1
        %s226 = smul.addr %s225, 16
        %s227 = smul.addr %s226, 8
        %s228 = scalar_lea.vmem %s1, %s227
        %p229 = pneg %p63
        %p230 = pneg %p60
        %p231 = pneg %p84
        %p232 = pneg %p81
        %p233 = pneg %p105
        %p234 = pneg %p102
        %p235 = pneg %p126
        %p236 = pneg %p123
        %p237 = pneg %p147
        %p238 = pneg %p144
        %p239 = pneg %p173
        %p240 = pneg %p170
        %s241 = sand.u32 %s160, 1
        %s242 = scalar_lea.sflag [#allocation4], %s241
        %s243 = sand.u32 %s160, 1
        %s244 = smul.addr %s243, 4
        %s245 = scalar_lea.vmem [#allocation3], %s244
        %p246 = scmp.lt.s32.totalorder %s21, 1
        %s247 = scalar_select %p246, %s21, 1
        %s248 = smul.addr %s247, 16
        %s249 = smul.addr %s248, 8
        %s250 = scalar_lea.vmem %s1, %s249
        %v252 = vld [vmem:[%s250] sm:$0xff]
        %v253 = vld [vmem:[%s250 + $0x8] sm:$0xff]
        %v254 = vld [vmem:[%s250 + $0x10] sm:$0xff]
        %v255 = vld [vmem:[%s250 + $0x18] sm:$0xff]
        %v256 = vld [vmem:[%s250 + $0x20] sm:$0xff]
        %v257 = vld [vmem:[%s250 + $0x28] sm:$0xff]
        %v258 = vld [vmem:[%s250 + $0x30] sm:$0xff]
        %v259 = vld [vmem:[%s250 + $0x38] sm:$0xff]
        %v260 = vld [vmem:[%s250 + $0x40] sm:$0xff]
        %v261 = vld [vmem:[%s250 + $0x48] sm:$0xff]
        %v262 = vld [vmem:[%s250 + $0x50] sm:$0xff]
        %v263 = vld [vmem:[%s250 + $0x58] sm:$0xff]
        %v264 = vld [vmem:[%s250 + $0x60] sm:$0x3]
        %v265 = vld [vmem:[%s250 + $0x68] sm:$0x3]
        %v266 = vld [vmem:[%s250 + $0x70] sm:$0x3]
        %v267 = vld [vmem:[%s250 + $0x78] sm:$0x3]
        %v268 = vld [vmem:[%s2] sm:$0xf]
        %v269 = vld [vmem:[%s2 + $0x4] sm:$0xf]
        %v270 = vld [vmem:[%s2 + $0x8] sm:$0xf]
        %v271 = vld [vmem:[%s2 + $0xc] sm:$0xf]
        %v272 = vld [vmem:[%s2 + $0x10] sm:$0xf]
        %v273 = vld [vmem:[%s2 + $0x14] sm:$0xf]
        %v274 = vld [vmem:[%s2 + $0x18] sm:$0xf]
        %v275 = vld [vmem:[%s2 + $0x1c] sm:$0xf]
        %v276 = vld [vmem:[%s2 + $0x20] sm:$0xf]
        %v277 = vld [vmem:[%s2 + $0x24] sm:$0xf]
        %v278 = vld [vmem:[%s2 + $0x28] sm:$0xf]
        %v279 = vld [vmem:[%s2 + $0x2c] sm:$0xf]
        %v280 = vld [vmem:[%s2 + $0x30] sm:$0xf]
        %v281 = vld [vmem:[%s2 + $0x34] sm:$0xf]
        %v282 = vld [vmem:[%s2 + $0x38] sm:$0xf]
        %v283 = vld [vmem:[%s2 + $0x3c] sm:$0xf]
        %v284 = vpack.c.bf16 %v256, %v252
        %v285 = vpack.c.bf16 %v257, %v253
        %v286 = vpack.c.bf16 %v258, %v254
        %v287 = vpack.c.bf16 %v259, %v255
        %v288 = vpack.c.bf16 %v264, %v260
        %v289 = vpack.c.bf16 %v265, %v261
        %v290 = vpack.c.bf16 %v266, %v262
        %v291 = vpack.c.bf16 %v267, %v263
        %v308 = vunpack.c.l.b16 %v268
        %v309 = vunpack.c.l.b16 %v269
        %v310 = vunpack.c.l.b16 %v270
        %v311 = vunpack.c.l.b16 %v271
        %v312 = vunpack.c.l.b16 %v272
        %v313 = vunpack.c.l.b16 %v273
        %v314 = vunpack.c.l.b16 %v274
        %v315 = vunpack.c.l.b16 %v275
        %v316 = vunpack.c.l.b16 %v276
        %v317 = vunpack.c.l.b16 %v277
        %v318 = vunpack.c.l.b16 %v278
        %v319 = vunpack.c.l.b16 %v279
        %v320 = vunpack.c.l.b16 %v280
        %v321 = vunpack.c.l.b16 %v281
        %v322 = vunpack.c.l.b16 %v282
        %v323 = vunpack.c.l.b16 %v283
        %v324 = vpack.c.b16 %v309, %v308
        %v325 = vpack.c.b16 %v311, %v310
        %v326 = vpack.c.b16 %v313, %v312
        %v327 = vpack.c.b16 %v315, %v314
        %v328 = vpack.c.b16 %v317, %v316
        %v329 = vpack.c.b16 %v319, %v318
        %v330 = vpack.c.b16 %v321, %v320
        %v331 = vpack.c.b16 %v323, %v322
        %vm332 = vcmask 211968
        %v334 = vsel %vm332, %v324, 0
        %v337 = vsel %vm332, %v325, 0
        %v340 = vsel %vm332, %v326, 0
        %v343 = vsel %vm332, %v327, 0
        %v346 = vsel %vm332, %v328, 0
        %v349 = vsel %vm332, %v329, 0
        %v352 = vsel %vm332, %v330, 0
        %v355 = vsel %vm332, %v331, 0
        %vm357 = vcmask 1044480
        %v359 = vsel %vm357, %v288, 0
        %v362 = vsel %vm357, %v289, 0
        %v365 = vsel %vm357, %v290, 0
        %v368 = vsel %vm357, %v291, 0
        %370 = vmatprep.subr.bf16.mxu0 0
        %371 = vmatpush1.bf16.msra.mxu0 0
        %372 = vmatprep.subr.bf16.mxu0 0
        %373 = vmatpush1.bf16.msra.mxu0 0
        %374 = vmatprep.subr.bf16.mxu0 0
        %375 = vmatpush1.bf16.msra.mxu0 0
        %376 = vmatprep.subr.bf16.mxu0 0
        %377 = vmatpush1.bf16.msra.mxu0 0
        %378 = vmatprep.subr.bf16.mxu0 0
        %379 = vmatpush1.bf16.msra.mxu0 0
        %380 = vmatprep.subr.bf16.mxu0 0
        %381 = vmatpush1.bf16.msra.mxu0 0
        %382 = vmatprep.subr.bf16.mxu0 %v362
        %383 = vmatpush1.bf16.msra.mxu0 %v359
        %384 = vmatprep.subr.bf16.mxu0 %v285
        %385 = vmatpush1.bf16.msra.mxu0 %v284
        %386 = vmatprep.subr.bf16.mxu0 0
        %387 = vmatpush2.bf16.msra.mxu0 0
        %388 = vmatprep.subr.bf16.mxu0 0
        %389 = vmatpush2.bf16.msra.mxu0 0
        %390 = vmatprep.subr.bf16.mxu0 0
        %391 = vmatpush2.bf16.msra.mxu0 0
        %392 = vmatprep.subr.bf16.mxu0 0
        %393 = vmatpush2.bf16.msra.mxu0 0
        %394 = vmatprep.subr.bf16.mxu0 0
        %395 = vmatpush2.bf16.msra.mxu0 0
        %396 = vmatprep.subr.bf16.mxu0 0
        %397 = vmatpush2.bf16.msra.mxu0 0
        %398 = vmatprep.subr.bf16.mxu0 0
        %399 = vmatpush2.bf16.msra.mxu0 0
        %400 = vmatprep.subr.bf16.mxu0 0
        %401 = vmatpush2.bf16.msra.mxu0 0
        %402 = vmatprep.mubr.bf16.mxu0 0
        %403 = vmatmul.mubr.bf16.gmra.mxu0 %v334
        %v404 = vpop.f32.mrf.mxu0
        %v405 = vadd.f32 0.0, %v404
        %v406 = vpop.f32.mrf.mxu0
        %v407 = vadd.f32 0.0, %v406
        %v408 = vpop.f32.mrf.mxu0
        %v409 = vadd.f32 0.0, %v408
        %v410 = vpop.f32.mrf.mxu0
        %v411 = vadd.f32 0.0, %v410
        %412 = vmatprep.mubr.bf16.mxu0 0
        %413 = vmatmul.mubr.bf16.gmra.mxu0 %v337
        %v414 = vpop.f32.mrf.mxu0
        %v415 = vadd.f32 0.0, %v414
        %v416 = vpop.f32.mrf.mxu0
        %v417 = vadd.f32 0.0, %v416
        %v418 = vpop.f32.mrf.mxu0
        %v419 = vadd.f32 0.0, %v418
        %v420 = vpop.f32.mrf.mxu0
        %v421 = vadd.f32 0.0, %v420
        %422 = vmatprep.mubr.bf16.mxu0 0
        %423 = vmatmul.mubr.bf16.gmra.mxu0 %v340
        %v424 = vpop.f32.mrf.mxu0
        %v425 = vadd.f32 0.0, %v424
        %v426 = vpop.f32.mrf.mxu0
        %v427 = vadd.f32 0.0, %v426
        %v428 = vpop.f32.mrf.mxu0
        %v429 = vadd.f32 0.0, %v428
        %v430 = vpop.f32.mrf.mxu0
        %v431 = vadd.f32 0.0, %v430
        %432 = vmatprep.mubr.bf16.mxu0 0
        %433 = vmatmul.mubr.bf16.gmra.mxu0 %v343
        %v434 = vpop.f32.mrf.mxu0
        %v435 = vadd.f32 0.0, %v434
        %v436 = vpop.f32.mrf.mxu0
        %v437 = vadd.f32 0.0, %v436
        %v438 = vpop.f32.mrf.mxu0
        %v439 = vadd.f32 0.0, %v438
        %v440 = vpop.f32.mrf.mxu0
        %v441 = vadd.f32 0.0, %v440
        %442 = vmatprep.mubr.bf16.mxu0 0
        %443 = vmatmul.mubr.bf16.gmra.mxu0 %v346
        %v444 = vpop.f32.mrf.mxu0
        %v445 = vadd.f32 0.0, %v444
        %v446 = vpop.f32.mrf.mxu0
        %v447 = vadd.f32 0.0, %v446
        %v448 = vpop.f32.mrf.mxu0
        %v449 = vadd.f32 0.0, %v448
        %v450 = vpop.f32.mrf.mxu0
        %v451 = vadd.f32 0.0, %v450
        %452 = vmatprep.mubr.bf16.mxu0 0
        %453 = vmatmul.mubr.bf16.gmra.mxu0 %v349
        %v454 = vpop.f32.mrf.mxu0
        %v455 = vadd.f32 0.0, %v454
        %v456 = vpop.f32.mrf.mxu0
        %v457 = vadd.f32 0.0, %v456
        %v458 = vpop.f32.mrf.mxu0
        %v459 = vadd.f32 0.0, %v458
        %v460 = vpop.f32.mrf.mxu0
        %v461 = vadd.f32 0.0, %v460
        %462 = vmatprep.mubr.bf16.mxu0 0
        %463 = vmatmul.mubr.bf16.gmra.mxu0 %v352
        %v464 = vpop.f32.mrf.mxu0
        %v465 = vadd.f32 0.0, %v464
        %v466 = vpop.f32.mrf.mxu0
        %v467 = vadd.f32 0.0, %v466
        %v468 = vpop.f32.mrf.mxu0
        %v469 = vadd.f32 0.0, %v468
        %v470 = vpop.f32.mrf.mxu0
        %v471 = vadd.f32 0.0, %v470
        %472 = vmatprep.mubr.bf16.mxu0 0
        %473 = vmatmul.mubr.bf16.gmra.mxu0 %v355
        %v474 = vpop.f32.mrf.mxu0
        %v475 = vadd.f32 0.0, %v474
        %v476 = vpop.f32.mrf.mxu0
        %v477 = vadd.f32 0.0, %v476
        %v478 = vpop.f32.mrf.mxu0
        %v479 = vadd.f32 0.0, %v478
        %v480 = vpop.f32.mrf.mxu0
        %v481 = vadd.f32 0.0, %v480
        %482 = vdwg.mxu0
        %483 = vmatprep.subr.bf16.mxu0 0
        %484 = vmatpush1.bf16.msra.mxu0 0
        %485 = vmatprep.subr.bf16.mxu0 0
        %486 = vmatpush1.bf16.msra.mxu0 0
        %487 = vmatprep.subr.bf16.mxu0 0
        %488 = vmatpush1.bf16.msra.mxu0 0
        %489 = vmatprep.subr.bf16.mxu0 0
        %490 = vmatpush1.bf16.msra.mxu0 0
        %491 = vmatprep.subr.bf16.mxu0 0
        %492 = vmatpush1.bf16.msra.mxu0 0
        %493 = vmatprep.subr.bf16.mxu0 0
        %494 = vmatpush1.bf16.msra.mxu0 0
        %495 = vmatprep.subr.bf16.mxu0 %v368
        %496 = vmatpush1.bf16.msra.mxu0 %v365
        %497 = vmatprep.subr.bf16.mxu0 %v287
        %498 = vmatpush1.bf16.msra.mxu0 %v286
        %499 = vmatprep.subr.bf16.mxu0 0
        %500 = vmatpush2.bf16.msra.mxu0 0
        %501 = vmatprep.subr.bf16.mxu0 0
        %502 = vmatpush2.bf16.msra.mxu0 0
        %503 = vmatprep.subr.bf16.mxu0 0
        %504 = vmatpush2.bf16.msra.mxu0 0
        %505 = vmatprep.subr.bf16.mxu0 0
        %506 = vmatpush2.bf16.msra.mxu0 0
        %507 = vmatprep.subr.bf16.mxu0 0
        %508 = vmatpush2.bf16.msra.mxu0 0
        %509 = vmatprep.subr.bf16.mxu0 0
        %510 = vmatpush2.bf16.msra.mxu0 0
        %511 = vmatprep.subr.bf16.mxu0 0
        %512 = vmatpush2.bf16.msra.mxu0 0
        %513 = vmatprep.subr.bf16.mxu0 0
        %514 = vmatpush2.bf16.msra.mxu0 0
        %515 = vmatprep.mubr.bf16.mxu0 0
        %516 = vmatmul.mubr.bf16.gmra.mxu0 %v334
        %v517 = vpop.f32.mrf.mxu0
        %v518 = vadd.f32 0.0, %v517
        %v519 = vpop.f32.mrf.mxu0
        %v520 = vadd.f32 0.0, %v519
        %v521 = vpop.f32.mrf.mxu0
        %v522 = vadd.f32 0.0, %v521
        %v523 = vpop.f32.mrf.mxu0
        %v524 = vadd.f32 0.0, %v523
        %525 = vmatprep.mubr.bf16.mxu0 0
        %526 = vmatmul.mubr.bf16.gmra.mxu0 %v337
        %v527 = vpop.f32.mrf.mxu0
        %v528 = vadd.f32 0.0, %v527
        %v529 = vpop.f32.mrf.mxu0
        %v530 = vadd.f32 0.0, %v529
        %v531 = vpop.f32.mrf.mxu0
        %v532 = vadd.f32 0.0, %v531
        %v533 = vpop.f32.mrf.mxu0
        %v534 = vadd.f32 0.0, %v533
        %535 = vmatprep.mubr.bf16.mxu0 0
        %536 = vmatmul.mubr.bf16.gmra.mxu0 %v340
        %v537 = vpop.f32.mrf.mxu0
        %v538 = vadd.f32 0.0, %v537
        %v539 = vpop.f32.mrf.mxu0
        %v540 = vadd.f32 0.0, %v539
        %v541 = vpop.f32.mrf.mxu0
        %v542 = vadd.f32 0.0, %v541
        %v543 = vpop.f32.mrf.mxu0
        %v544 = vadd.f32 0.0, %v543
        %545 = vmatprep.mubr.bf16.mxu0 0
        %546 = vmatmul.mubr.bf16.gmra.mxu0 %v343
        %v547 = vpop.f32.mrf.mxu0
        %v548 = vadd.f32 0.0, %v547
        %v549 = vpop.f32.mrf.mxu0
        %v550 = vadd.f32 0.0, %v549
        %v551 = vpop.f32.mrf.mxu0
        %v552 = vadd.f32 0.0, %v551
        %v553 = vpop.f32.mrf.mxu0
        %v554 = vadd.f32 0.0, %v553
        %555 = vmatprep.mubr.bf16.mxu0 0
        %556 = vmatmul.mubr.bf16.gmra.mxu0 %v346
        %v557 = vpop.f32.mrf.mxu0
        %v558 = vadd.f32 0.0, %v557
        %v559 = vpop.f32.mrf.mxu0
        %v560 = vadd.f32 0.0, %v559
        %v561 = vpop.f32.mrf.mxu0
        %v562 = vadd.f32 0.0, %v561
        %v563 = vpop.f32.mrf.mxu0
        %v564 = vadd.f32 0.0, %v563
        %565 = vmatprep.mubr.bf16.mxu0 0
        %566 = vmatmul.mubr.bf16.gmra.mxu0 %v349
        %v567 = vpop.f32.mrf.mxu0
        %v568 = vadd.f32 0.0, %v567
        %v569 = vpop.f32.mrf.mxu0
        %v570 = vadd.f32 0.0, %v569
        %v571 = vpop.f32.mrf.mxu0
        %v572 = vadd.f32 0.0, %v571
        %v573 = vpop.f32.mrf.mxu0
        %v574 = vadd.f32 0.0, %v573
        %575 = vmatprep.mubr.bf16.mxu0 0
        %576 = vmatmul.mubr.bf16.gmra.mxu0 %v352
        %v577 = vpop.f32.mrf.mxu0
        %v578 = vadd.f32 0.0, %v577
        %v579 = vpop.f32.mrf.mxu0
        %v580 = vadd.f32 0.0, %v579
        %v581 = vpop.f32.mrf.mxu0
        %v582 = vadd.f32 0.0, %v581
        %v583 = vpop.f32.mrf.mxu0
        %v584 = vadd.f32 0.0, %v583
        %585 = vmatprep.mubr.bf16.mxu0 0
        %586 = vmatmul.mubr.bf16.gmra.mxu0 %v355
        %v587 = vpop.f32.mrf.mxu0
        %v588 = vadd.f32 0.0, %v587
        %v589 = vpop.f32.mrf.mxu0
        %v590 = vadd.f32 0.0, %v589
        %v591 = vpop.f32.mrf.mxu0
        %v592 = vadd.f32 0.0, %v591
        %v593 = vpop.f32.mrf.mxu0
        %v594 = vadd.f32 0.0, %v593
        %595 = vdwg.mxu0
        %v596 = vmax.f32 %v405, 0.0
        %v597 = vmax.f32 %v407, 0.0
        %v598 = vmax.f32 %v518, 0.0
        %v599 = vmax.f32 %v520, 0.0
        %v600 = vmax.f32 %v409, 0.0
        %v601 = vmax.f32 %v411, 0.0
        %v602 = vmax.f32 %v522, 0.0
        %v603 = vmax.f32 %v524, 0.0
        %v604 = vmax.f32 %v415, 0.0
        %v605 = vmax.f32 %v417, 0.0
        %v606 = vmax.f32 %v528, 0.0
        %v607 = vmax.f32 %v530, 0.0
        %v608 = vmax.f32 %v419, 0.0
        %v609 = vmax.f32 %v421, 0.0
        %v610 = vmax.f32 %v532, 0.0
        %v611 = vmax.f32 %v534, 0.0
        %v612 = vmax.f32 %v425, 0.0
        %v613 = vmax.f32 %v427, 0.0
        %v614 = vmax.f32 %v538, 0.0
        %v615 = vmax.f32 %v540, 0.0
        %v616 = vmax.f32 %v429, 0.0
        %v617 = vmax.f32 %v431, 0.0
        %v618 = vmax.f32 %v542, 0.0
        %v619 = vmax.f32 %v544, 0.0
        %v620 = vmax.f32 %v435, 0.0
        %v621 = vmax.f32 %v437, 0.0
        %v622 = vmax.f32 %v548, 0.0
        %v623 = vmax.f32 %v550, 0.0
        %v624 = vmax.f32 %v439, 0.0
        %v625 = vmax.f32 %v441, 0.0
        %v626 = vmax.f32 %v552, 0.0
        %v627 = vmax.f32 %v554, 0.0
        %v628 = vmax.f32 %v445, 0.0
        %v629 = vmax.f32 %v447, 0.0
        %v630 = vmax.f32 %v558, 0.0
        %v631 = vmax.f32 %v560, 0.0
        %v632 = vmax.f32 %v449, 0.0
        %v633 = vmax.f32 %v451, 0.0
        %v634 = vmax.f32 %v562, 0.0
        %v635 = vmax.f32 %v564, 0.0
        %v636 = vmax.f32 %v455, 0.0
        %v637 = vmax.f32 %v457, 0.0
        %v638 = vmax.f32 %v568, 0.0
        %v639 = vmax.f32 %v570, 0.0
        %v640 = vmax.f32 %v459, 0.0
        %v641 = vmax.f32 %v461, 0.0
        %v642 = vmax.f32 %v572, 0.0
        %v643 = vmax.f32 %v574, 0.0
        %v644 = vmax.f32 %v465, 0.0
        %v645 = vmax.f32 %v467, 0.0
        %v646 = vmax.f32 %v578, 0.0
        %v647 = vmax.f32 %v580, 0.0
        %v648 = vmax.f32 %v469, 0.0
        %v649 = vmax.f32 %v471, 0.0
        %v650 = vmax.f32 %v582, 0.0
        %v651 = vmax.f32 %v584, 0.0
        %v652 = vmax.f32 %v475, 0.0
        %v653 = vmax.f32 %v477, 0.0
        %v654 = vmax.f32 %v588, 0.0
        %v655 = vmax.f32 %v590, 0.0
        %v656 = vmax.f32 %v479, 0.0
        %v657 = vmax.f32 %v481, 0.0
        %v658 = vmax.f32 %v592, 0.0
        %v659 = vmax.f32 %v594, 0.0
        %v660 = vld [vmem:[%s3] sm:$0xf]
        %v661 = vld [vmem:[%s3 + $0x4] sm:$0xf]
        %v662 = vld [vmem:[%s3 + $0x8] sm:$0xf]
        %v663 = vld [vmem:[%s3 + $0xc] sm:$0x1]
        %v664 = vpack.c.bf16 %v600, %v596
        %v665 = vpack.c.bf16 %v601, %v597
        %v666 = vpack.c.bf16 %v602, %v598
        %v667 = vpack.c.bf16 %v603, %v599
        %v668 = vpack.c.bf16 %v608, %v604
        %v669 = vpack.c.bf16 %v609, %v605
        %v670 = vpack.c.bf16 %v610, %v606
        %v671 = vpack.c.bf16 %v611, %v607
        %v672 = vpack.c.bf16 %v616, %v612
        %v673 = vpack.c.bf16 %v617, %v613
        %v674 = vpack.c.bf16 %v618, %v614
        %v675 = vpack.c.bf16 %v619, %v615
        %v676 = vpack.c.bf16 %v624, %v620
        %v677 = vpack.c.bf16 %v625, %v621
        %v678 = vpack.c.bf16 %v626, %v622
        %v679 = vpack.c.bf16 %v627, %v623
        %v680 = vpack.c.bf16 %v632, %v628
        %v681 = vpack.c.bf16 %v633, %v629
        %v682 = vpack.c.bf16 %v634, %v630
        %v683 = vpack.c.bf16 %v635, %v631
        %v684 = vpack.c.bf16 %v640, %v636
        %v685 = vpack.c.bf16 %v641, %v637
        %v686 = vpack.c.bf16 %v642, %v638
        %v687 = vpack.c.bf16 %v643, %v639
        %v688 = vpack.c.bf16 %v648, %v644
        %v689 = vpack.c.bf16 %v649, %v645
        %v690 = vpack.c.bf16 %v650, %v646
        %v691 = vpack.c.bf16 %v651, %v647
        %v692 = vpack.c.bf16 %v656, %v652
        %v693 = vpack.c.bf16 %v657, %v653
        %v694 = vpack.c.bf16 %v658, %v654
        %v695 = vpack.c.bf16 %v659, %v655
        %v700 = vunpack.c.l.b16 %v660
        %v701 = vunpack.c.l.b16 %v661
        %v702 = vunpack.c.l.b16 %v662
        %v703 = vunpack.c.l.b16 %v663
        %v704 = vpack.c.b16 %v701, %v700
        %v705 = vpack.c.b16 %v703, %v702
        %708 = vmatprep.subr.bf16.mxu0 %v693
        %709 = vmatpush1.bf16.msra.mxu0 %v692
        %710 = vmatprep.subr.bf16.mxu0 %v689
        %711 = vmatpush1.bf16.msra.mxu0 %v688
        %712 = vmatprep.subr.bf16.mxu0 %v685
        %713 = vmatpush1.bf16.msra.mxu0 %v684
        %714 = vmatprep.subr.bf16.mxu0 %v681
        %715 = vmatpush1.bf16.msra.mxu0 %v680
        %716 = vmatprep.subr.bf16.mxu0 %v677
        %717 = vmatpush1.bf16.msra.mxu0 %v676
        %718 = vmatprep.subr.bf16.mxu0 %v673
        %719 = vmatpush1.bf16.msra.mxu0 %v672
        %720 = vmatprep.subr.bf16.mxu0 %v669
        %721 = vmatpush1.bf16.msra.mxu0 %v668
        %722 = vmatprep.subr.bf16.mxu0 %v665
        %723 = vmatpush1.bf16.msra.mxu0 %v664
        %724 = vmatprep.subr.bf16.mxu0 0
        %725 = vmatpush2.bf16.msra.mxu0 0
        %726 = vmatprep.subr.bf16.mxu0 0
        %727 = vmatpush2.bf16.msra.mxu0 0
        %728 = vmatprep.subr.bf16.mxu0 0
        %729 = vmatpush2.bf16.msra.mxu0 0
        %730 = vmatprep.subr.bf16.mxu0 0
        %731 = vmatpush2.bf16.msra.mxu0 0
        %732 = vmatprep.subr.bf16.mxu0 0
        %733 = vmatpush2.bf16.msra.mxu0 0
        %734 = vmatprep.subr.bf16.mxu0 0
        %735 = vmatpush2.bf16.msra.mxu0 0
        %736 = vmatprep.subr.bf16.mxu0 0
        %737 = vmatpush2.bf16.msra.mxu0 0
        %738 = vmatprep.subr.bf16.mxu0 0
        %739 = vmatpush2.bf16.msra.mxu0 0
        %740 = vmatprep.mubr.bf16.mxu0 0
        %741 = vmatmul.mubr.bf16.gmra.mxu0 %v704
        %v742 = vpop.f32.mrf.mxu0
        %v743 = vadd.f32 0.0, %v742
        %v744 = vpop.f32.mrf.mxu0
        %v745 = vadd.f32 0.0, %v744
        %v746 = vpop.f32.mrf.mxu0
        %v747 = vadd.f32 0.0, %v746
        %v748 = vpop.f32.mrf.mxu0
        %v749 = vadd.f32 0.0, %v748
        %750 = vmatprep.mubr.bf16.mxu0 0
        %751 = vmatmul.mubr.bf16.gmra.mxu0 %v705
        %v752 = vpop.f32.mrf.mxu0
        %v753 = vadd.f32 0.0, %v752
        %v754 = vpop.f32.mrf.mxu0
        %v755 = vadd.f32 0.0, %v754
        %v756 = vpop.f32.mrf.mxu0
        %v757 = vadd.f32 0.0, %v756
        %v758 = vpop.f32.mrf.mxu0
        %v759 = vadd.f32 0.0, %v758
        %760 = vdwg.mxu0
        %761 = vmatprep.subr.bf16.mxu0 %v695
        %762 = vmatpush1.bf16.msra.mxu0 %v694
        %763 = vmatprep.subr.bf16.mxu0 %v691
        %764 = vmatpush1.bf16.msra.mxu0 %v690
        %765 = vmatprep.subr.bf16.mxu0 %v687
        %766 = vmatpush1.bf16.msra.mxu0 %v686
        %767 = vmatprep.subr.bf16.mxu0 %v683
        %768 = vmatpush1.bf16.msra.mxu0 %v682
        %769 = vmatprep.subr.bf16.mxu0 %v679
        %770 = vmatpush1.bf16.msra.mxu0 %v678
        %771 = vmatprep.subr.bf16.mxu0 %v675
        %772 = vmatpush1.bf16.msra.mxu0 %v674
        %773 = vmatprep.subr.bf16.mxu0 %v671
        %774 = vmatpush1.bf16.msra.mxu0 %v670
        %775 = vmatprep.subr.bf16.mxu0 %v667
        %776 = vmatpush1.bf16.msra.mxu0 %v666
        %777 = vmatprep.subr.bf16.mxu0 0
        %778 = vmatpush2.bf16.msra.mxu0 0
        %779 = vmatprep.subr.bf16.mxu0 0
        %780 = vmatpush2.bf16.msra.mxu0 0
        %781 = vmatprep.subr.bf16.mxu0 0
        %782 = vmatpush2.bf16.msra.mxu0 0
        %783 = vmatprep.subr.bf16.mxu0 0
        %784 = vmatpush2.bf16.msra.mxu0 0
        %785 = vmatprep.subr.bf16.mxu0 0
        %786 = vmatpush2.bf16.msra.mxu0 0
        %787 = vmatprep.subr.bf16.mxu0 0
        %788 = vmatpush2.bf16.msra.mxu0 0
        %789 = vmatprep.subr.bf16.mxu0 0
        %790 = vmatpush2.bf16.msra.mxu0 0
        %791 = vmatprep.subr.bf16.mxu0 0
        %792 = vmatpush2.bf16.msra.mxu0 0
        %793 = vmatprep.mubr.bf16.mxu0 0
        %794 = vmatmul.mubr.bf16.gmra.mxu0 %v704
        %v795 = vpop.f32.mrf.mxu0
        %v796 = vadd.f32 0.0, %v795
        %v797 = vpop.f32.mrf.mxu0
        %v798 = vadd.f32 0.0, %v797
        %v799 = vpop.f32.mrf.mxu0
        %v800 = vadd.f32 0.0, %v799
        %v801 = vpop.f32.mrf.mxu0
        %v802 = vadd.f32 0.0, %v801
        %803 = vmatprep.mubr.bf16.mxu0 0
        %804 = vmatmul.mubr.bf16.gmra.mxu0 %v705
        %v805 = vpop.f32.mrf.mxu0
        %v806 = vadd.f32 0.0, %v805
        %v807 = vpop.f32.mrf.mxu0
        %v808 = vadd.f32 0.0, %v807
        %v809 = vpop.f32.mrf.mxu0
        %v810 = vadd.f32 0.0, %v809
        %v811 = vpop.f32.mrf.mxu0
        %v812 = vadd.f32 0.0, %v811
        %813 = vdwg.mxu0
        %814 = vrot.lane.b32.xlu0 %v743, 32
        %v815 = vpop.permute.xlu0 %814
        %816 = vrot.lane.b32.xlu0 %v745, 32
        %v817 = vpop.permute.xlu0 %816
        %818 = vrot.lane.b32.xlu0 %v796, 32
        %v819 = vpop.permute.xlu0 %818
        %820 = vrot.lane.b32.xlu0 %v798, 32
        %v821 = vpop.permute.xlu0 %820
        %v822 = vlaneseq
        %v823 = vand.u32 %v822, 127
        %vm824 = vcmp.lt.s32.totalorder %v823, 32
        %v825 = vsel %vm824, %v819, %v821
        %v826 = vsel %vm824, %v817, %v819
        %v827 = vsel %vm824, %v815, %v817
        %v828 = vsel %vm824, %v821, %v815
        %v829 = vld [vmem:[%s4] ss:$8 sm:$0xf]
        %v831 = vlaneseq
        %v832 = vshrl.u32 %v831, 7
        %v833 = vsub.s32 0, %v832
        %v834 = vrot.slane %v829, %v833
        %v835 = vlaneseq
        %v836 = vshrl.u32 %v835, 7
        %v837 = vsub.s32 1, %v836
        %v838 = vrot.slane %v829, %v837
        %v839 = vlaneseq
        %v840 = vshrl.u32 %v839, 7
        %v841 = vsub.s32 2, %v840
        %v842 = vrot.slane %v829, %v841
        %v843 = vlaneseq
        %v844 = vshrl.u32 %v843, 7
        %v845 = vsub.s32 3, %v844
        %v846 = vrot.slane %v829, %v845
        %v851 = vmul.f32 %v828, %v834
        %v852 = vmul.f32 %v827, %v838
        %v853 = vmul.f32 %v826, %v842
        %v854 = vmul.f32 %v825, %v846
        %vm863 = vcmask 1042432
        %v864 = vrot.slane %v743, 5
        %v865 = vrot.slane %v747, 5
        %v866 = vsel %vm863, %v864, %v865
        %v867 = vrot.slane %v745, 5
        %v868 = vrot.slane %v749, 5
        %v869 = vsel %vm863, %v867, %v868
        %v870 = vrot.slane %v796, 5
        %v871 = vrot.slane %v800, 5
        %v872 = vsel %vm863, %v870, %v871
        %v873 = vrot.slane %v798, 5
        %v874 = vrot.slane %v802, 5
        %v875 = vsel %vm863, %v873, %v874
        %880 = vrot.lane.b32.xlu0 %v866, 16
        %v881 = vpop.permute.xlu0 %880
        %882 = vrot.lane.b32.xlu0 %v869, 16
        %v883 = vpop.permute.xlu0 %882
        %884 = vrot.lane.b32.xlu0 %v872, 16
        %v885 = vpop.permute.xlu0 %884
        %886 = vrot.lane.b32.xlu0 %v875, 16
        %v887 = vpop.permute.xlu0 %886
        %vm888 = vcmp.lt.s32.totalorder %v823, 16
        %v889 = vsel %vm888, %v885, %v887
        %v890 = vsel %vm888, %v883, %v885
        %v891 = vsel %vm888, %v881, %v883
        %v892 = vsel %vm888, %v887, %v881
        %s893 = scalar_lea.vmem %s4, 1
        %v894 = vld [vmem:[%s893] ss:$8 sm:$0xf]
        %v896 = vlaneseq
        %v897 = vshrl.u32 %v896, 7
        %v898 = vsub.s32 0, %v897
        %v899 = vrot.slane %v894, %v898
        %v900 = vlaneseq
        %v901 = vshrl.u32 %v900, 7
        %v902 = vsub.s32 1, %v901
        %v903 = vrot.slane %v894, %v902
        %v904 = vlaneseq
        %v905 = vshrl.u32 %v904, 7
        %v906 = vsub.s32 2, %v905
        %v907 = vrot.slane %v894, %v906
        %v908 = vlaneseq
        %v909 = vshrl.u32 %v908, 7
        %v910 = vsub.s32 3, %v909
        %v911 = vrot.slane %v894, %v910
        %v916 = vmul.f32 %v892, %v899
        %v917 = vmul.f32 %v891, %v903
        %v918 = vmul.f32 %v890, %v907
        %v919 = vmul.f32 %v889, %v911
        %s920 = scalar_lea.vmem %s4, 2
        %v921 = vld [vmem:[%s920] ss:$8 sm:$0xf]
        %v923 = vlaneseq
        %v924 = vshrl.u32 %v923, 7
        %v925 = vsub.s32 0, %v924
        %v926 = vrot.slane %v921, %v925
        %v927 = vlaneseq
        %v928 = vshrl.u32 %v927, 7
        %v929 = vsub.s32 1, %v928
        %v930 = vrot.slane %v921, %v929
        %v931 = vlaneseq
        %v932 = vshrl.u32 %v931, 7
        %v933 = vsub.s32 2, %v932
        %v934 = vrot.slane %v921, %v933
        %v935 = vlaneseq
        %v936 = vshrl.u32 %v935, 7
        %v937 = vsub.s32 3, %v936
        %v938 = vrot.slane %v921, %v937
        %v943 = vmul.f32 %v747, %v926
        %v944 = vmul.f32 %v749, %v930
        %v945 = vmul.f32 %v800, %v934
        %v946 = vmul.f32 %v802, %v938
        %vm951 = vcmask 1040384
        %v952 = vrot.slane %v747, 7
        %v953 = vrot.slane %v753, 7
        %v954 = vsel %vm951, %v952, %v953
        %v955 = vrot.slane %v749, 7
        %v956 = vrot.slane %v755, 7
        %v957 = vsel %vm951, %v955, %v956
        %v958 = vrot.slane %v800, 7
        %v959 = vrot.slane %v806, 7
        %v960 = vsel %vm951, %v958, %v959
        %v961 = vrot.slane %v802, 7
        %v962 = vrot.slane %v808, 7
        %v963 = vsel %vm951, %v961, %v962
        %968 = vrot.lane.b32.xlu0 %v954, 112
        %v969 = vpop.permute.xlu0 %968
        %970 = vrot.lane.b32.xlu0 %v957, 112
        %v971 = vpop.permute.xlu0 %970
        %972 = vrot.lane.b32.xlu0 %v960, 112
        %v973 = vpop.permute.xlu0 %972
        %974 = vrot.lane.b32.xlu0 %v963, 112
        %v975 = vpop.permute.xlu0 %974
        %vm976 = vcmp.lt.s32.totalorder %v823, 112
        %v977 = vsel %vm976, %v973, %v975
        %v978 = vsel %vm976, %v971, %v973
        %v979 = vsel %vm976, %v969, %v971
        %v980 = vsel %vm976, %v975, %v969
        %s981 = scalar_lea.vmem %s4, 3
        %v982 = vld [vmem:[%s981] ss:$8 sm:$0xf]
        %v984 = vlaneseq
        %v985 = vshrl.u32 %v984, 7
        %v986 = vsub.s32 0, %v985
        %v987 = vrot.slane %v982, %v986
        %v988 = vlaneseq
        %v989 = vshrl.u32 %v988, 7
        %v990 = vsub.s32 1, %v989
        %v991 = vrot.slane %v982, %v990
        %v992 = vlaneseq
        %v993 = vshrl.u32 %v992, 7
        %v994 = vsub.s32 2, %v993
        %v995 = vrot.slane %v982, %v994
        %v996 = vlaneseq
        %v997 = vshrl.u32 %v996, 7
        %v998 = vsub.s32 3, %v997
        %v999 = vrot.slane %v982, %v998
        %v1004 = vmul.f32 %v979, %v987
        %v1005 = vmul.f32 %v978, %v991
        %v1006 = vmul.f32 %v977, %v995
        %v1007 = vmul.f32 %v980, %v999
        %vm1012 = vcmask 1043456
        %v1013 = vrot.slane %v753, 4
        %v1014 = vrot.slane %v757, 4
        %v1015 = vsel %vm1012, %v1013, %v1014
        %v1016 = vrot.slane %v755, 4
        %v1017 = vrot.slane %v759, 4
        %v1018 = vsel %vm1012, %v1016, %v1017
        %v1019 = vrot.slane %v806, 4
        %v1020 = vrot.slane %v810, 4
        %v1021 = vsel %vm1012, %v1019, %v1020
        %v1022 = vrot.slane %v808, 4
        %v1023 = vrot.slane %v812, 4
        %v1024 = vsel %vm1012, %v1022, %v1023
        %1029 = vrot.lane.b32.xlu0 %v1015, 96
        %v1030 = vpop.permute.xlu0 %1029
        %1031 = vrot.lane.b32.xlu0 %v1018, 96
        %v1032 = vpop.permute.xlu0 %1031
        %1033 = vrot.lane.b32.xlu0 %v1021, 96
        %v1034 = vpop.permute.xlu0 %1033
        %1035 = vrot.lane.b32.xlu0 %v1024, 96
        %v1036 = vpop.permute.xlu0 %1035
        %vm1037 = vcmp.lt.s32.totalorder %v823, 96
        %v1038 = vsel %vm1037, %v1034, %v1036
        %v1039 = vsel %vm1037, %v1032, %v1034
        %v1040 = vsel %vm1037, %v1030, %v1032
        %v1041 = vsel %vm1037, %v1036, %v1030
        %s1042 = scalar_lea.vmem %s4, 4
        %v1043 = vld [vmem:[%s1042] ss:$8 sm:$0xf]
        %v1045 = vlaneseq
        %v1046 = vshrl.u32 %v1045, 7
        %v1047 = vsub.s32 0, %v1046
        %v1048 = vrot.slane %v1043, %v1047
        %v1049 = vlaneseq
        %v1050 = vshrl.u32 %v1049, 7
        %v1051 = vsub.s32 1, %v1050
        %v1052 = vrot.slane %v1043, %v1051
        %v1053 = vlaneseq
        %v1054 = vshrl.u32 %v1053, 7
        %v1055 = vsub.s32 2, %v1054
        %v1056 = vrot.slane %v1043, %v1055
        %v1057 = vlaneseq
        %v1058 = vshrl.u32 %v1057, 7
        %v1059 = vsub.s32 3, %v1058
        %v1060 = vrot.slane %v1043, %v1059
        %v1065 = vmul.f32 %v1040, %v1048
        %v1066 = vmul.f32 %v1039, %v1052
        %v1067 = vmul.f32 %v1038, %v1056
        %v1068 = vmul.f32 %v1041, %v1060
        %v1069 = vadd.f32 %v851, %v916
        %v1070 = vadd.f32 %v852, %v917
        %v1071 = vadd.f32 %v853, %v918
        %v1072 = vadd.f32 %v854, %v919
        %v1077 = vrot.slane %v1004, 6
        %v1078 = vrot.slane %v1005, 6
        %v1079 = vrot.slane %v1006, 6
        %v1080 = vrot.slane %v1007, 6
        %v1085 = vadd.f32 %v943, %v1077
        %v1086 = vadd.f32 %v944, %v1078
        %v1087 = vadd.f32 %v945, %v1079
        %v1088 = vadd.f32 %v946, %v1080
        %v1093 = vrot.slane %v1085, 2
        %v1094 = vrot.slane %v1086, 2
        %v1095 = vrot.slane %v1087, 2
        %v1096 = vrot.slane %v1088, 2
        %v1101 = vadd.f32 %v1069, %v1093
        %v1102 = vadd.f32 %v1070, %v1094
        %v1103 = vadd.f32 %v1071, %v1095
        %v1104 = vadd.f32 %v1072, %v1096
        %v1105 = vadd.f32 %v1101, %v1065
        %v1106 = vadd.f32 %v1102, %v1066
        %v1107 = vadd.f32 %v1103, %v1067
        %v1108 = vadd.f32 %v1104, %v1068
        %1109 = vrot.lane.b32.xlu0 %v1105, 2
        %v1110 = vpop.permute.xlu0 %1109
        %1111 = vrot.lane.b32.xlu0 %v1106, 2
        %v1112 = vpop.permute.xlu0 %1111
        %1113 = vrot.lane.b32.xlu0 %v1107, 2
        %v1114 = vpop.permute.xlu0 %1113
        %1115 = vrot.lane.b32.xlu0 %v1108, 2
        %v1116 = vpop.permute.xlu0 %1115
        %vm1117 = vcmp.lt.s32.totalorder %v823, 2
        %v1118 = vsel %vm1117, %v1114, %v1116
        %v1119 = vsel %vm1117, %v1112, %v1114
        %v1120 = vsel %vm1117, %v1110, %v1112
        %v1121 = vsel %vm1117, %v1116, %v1110
        %v1122 = vld [vmem:[%s5] ss:$8 sm:$0xf]
        %v1124 = vlaneseq
        %v1125 = vshrl.u32 %v1124, 7
        %v1126 = vsub.s32 0, %v1125
        %v1127 = vrot.slane %v1122, %v1126
        %v1128 = vlaneseq
        %v1129 = vshrl.u32 %v1128, 7
        %v1130 = vsub.s32 1, %v1129
        %v1131 = vrot.slane %v1122, %v1130
        %v1132 = vlaneseq
        %v1133 = vshrl.u32 %v1132, 7
        %v1134 = vsub.s32 2, %v1133
        %v1135 = vrot.slane %v1122, %v1134
        %v1136 = vlaneseq
        %v1137 = vshrl.u32 %v1136, 7
        %v1138 = vsub.s32 3, %v1137
        %v1139 = vrot.slane %v1122, %v1138
        %v1144 = vmul.f32 %v1121, %v1127
        %v1145 = vmul.f32 %v1120, %v1131
        %v1146 = vmul.f32 %v1119, %v1135
        %v1147 = vmul.f32 %v1118, %v1139
        %v1152 = vrot.slane %v1105, 1
        %v1153 = vrot.slane %v1106, 1
        %v1154 = vrot.slane %v1107, 1
        %v1155 = vrot.slane %v1108, 1
        %1160 = vrot.lane.b32.xlu0 %v1152, 1
        %v1161 = vpop.permute.xlu0 %1160
        %1162 = vrot.lane.b32.xlu0 %v1153, 1
        %v1163 = vpop.permute.xlu0 %1162
        %1164 = vrot.lane.b32.xlu0 %v1154, 1
        %v1165 = vpop.permute.xlu0 %1164
        %1166 = vrot.lane.b32.xlu0 %v1155, 1
        %v1167 = vpop.permute.xlu0 %1166
        %vm1168 = vcmp.lt.s32.totalorder %v823, 1
        %v1169 = vsel %vm1168, %v1165, %v1167
        %v1170 = vsel %vm1168, %v1163, %v1165
        %v1171 = vsel %vm1168, %v1161, %v1163
        %v1172 = vsel %vm1168, %v1167, %v1161
        %s1173 = scalar_lea.vmem %s5, 1
        %v1174 = vld [vmem:[%s1173] ss:$8 sm:$0xf]
        %v1176 = vlaneseq
        %v1177 = vshrl.u32 %v1176, 7
        %v1178 = vsub.s32 0, %v1177
        %v1179 = vrot.slane %v1174, %v1178
        %v1180 = vlaneseq
        %v1181 = vshrl.u32 %v1180, 7
        %v1182 = vsub.s32 1, %v1181
        %v1183 = vrot.slane %v1174, %v1182
        %v1184 = vlaneseq
        %v1185 = vshrl.u32 %v1184, 7
        %v1186 = vsub.s32 2, %v1185
        %v1187 = vrot.slane %v1174, %v1186
        %v1188 = vlaneseq
        %v1189 = vshrl.u32 %v1188, 7
        %v1190 = vsub.s32 3, %v1189
        %v1191 = vrot.slane %v1174, %v1190
        %v1196 = vmul.f32 %v1172, %v1179
        %v1197 = vmul.f32 %v1171, %v1183
        %v1198 = vmul.f32 %v1170, %v1187
        %v1199 = vmul.f32 %v1169, %v1191
        %s1200 = scalar_lea.vmem %s5, 2
        %v1201 = vld [vmem:[%s1200] ss:$8 sm:$0xf]
        %v1203 = vlaneseq
        %v1204 = vshrl.u32 %v1203, 7
        %v1205 = vsub.s32 0, %v1204
        %v1206 = vrot.slane %v1201, %v1205
        %v1207 = vlaneseq
        %v1208 = vshrl.u32 %v1207, 7
        %v1209 = vsub.s32 1, %v1208
        %v1210 = vrot.slane %v1201, %v1209
        %v1211 = vlaneseq
        %v1212 = vshrl.u32 %v1211, 7
        %v1213 = vsub.s32 2, %v1212
        %v1214 = vrot.slane %v1201, %v1213
        %v1215 = vlaneseq
        %v1216 = vshrl.u32 %v1215, 7
        %v1217 = vsub.s32 3, %v1216
        %v1218 = vrot.slane %v1201, %v1217
        %v1223 = vmul.f32 %v1105, %v1206
        %v1224 = vmul.f32 %v1106, %v1210
        %v1225 = vmul.f32 %v1107, %v1214
        %v1226 = vmul.f32 %v1108, %v1218
        %v1227 = vrot.slane %v1105, 3
        %v1228 = vrot.slane %v1106, 3
        %v1229 = vrot.slane %v1107, 3
        %v1230 = vrot.slane %v1108, 3
        %1235 = vrot.lane.b32.xlu0 %v1227, 127
        %v1236 = vpop.permute.xlu0 %1235
        %1237 = vrot.lane.b32.xlu0 %v1228, 127
        %v1238 = vpop.permute.xlu0 %1237
        %1239 = vrot.lane.b32.xlu0 %v1229, 127
        %v1240 = vpop.permute.xlu0 %1239
        %1241 = vrot.lane.b32.xlu0 %v1230, 127
        %v1242 = vpop.permute.xlu0 %1241
        %vm1243 = vcmp.lt.s32.totalorder %v823, 127
        %v1244 = vsel %vm1243, %v1240, %v1242
        %v1245 = vsel %vm1243, %v1238, %v1240
        %v1246 = vsel %vm1243, %v1236, %v1238
        %v1247 = vsel %vm1243, %v1242, %v1236
        %s1248 = scalar_lea.vmem %s5, 3
        %v1249 = vld [vmem:[%s1248] ss:$8 sm:$0xf]
        %v1251 = vlaneseq
        %v1252 = vshrl.u32 %v1251, 7
        %v1253 = vsub.s32 0, %v1252
        %v1254 = vrot.slane %v1249, %v1253
        %v1255 = vlaneseq
        %v1256 = vshrl.u32 %v1255, 7
        %v1257 = vsub.s32 1, %v1256
        %v1258 = vrot.slane %v1249, %v1257
        %v1259 = vlaneseq
        %v1260 = vshrl.u32 %v1259, 7
        %v1261 = vsub.s32 2, %v1260
        %v1262 = vrot.slane %v1249, %v1261
        %v1263 = vlaneseq
        %v1264 = vshrl.u32 %v1263, 7
        %v1265 = vsub.s32 3, %v1264
        %v1266 = vrot.slane %v1249, %v1265
        %v1271 = vmul.f32 %v1246, %v1254
        %v1272 = vmul.f32 %v1245, %v1258
        %v1273 = vmul.f32 %v1244, %v1262
        %v1274 = vmul.f32 %v1247, %v1266
        %v1275 = vrot.slane %v1105, 4
        %v1276 = vrot.slane %v1106, 4
        %v1277 = vrot.slane %v1107, 4
        %v1278 = vrot.slane %v1108, 4
        %1283 = vrot.lane.b32.xlu0 %v1275, 126
        %v1284 = vpop.permute.xlu0 %1283
        %1285 = vrot.lane.b32.xlu0 %v1276, 126
        %v1286 = vpop.permute.xlu0 %1285
        %1287 = vrot.lane.b32.xlu0 %v1277, 126
        %v1288 = vpop.permute.xlu0 %1287
        %1289 = vrot.lane.b32.xlu0 %v1278, 126
        %v1290 = vpop.permute.xlu0 %1289
        %vm1291 = vcmp.lt.s32.totalorder %v823, 126
        %v1292 = vsel %vm1291, %v1288, %v1290
        %v1293 = vsel %vm1291, %v1286, %v1288
        %v1294 = vsel %vm1291, %v1284, %v1286
        %v1295 = vsel %vm1291, %v1290, %v1284
        %s1296 = scalar_lea.vmem %s5, 4
        %v1297 = vld [vmem:[%s1296] ss:$8 sm:$0xf]
        %v1299 = vlaneseq
        %v1300 = vshrl.u32 %v1299, 7
        %v1301 = vsub.s32 0, %v1300
        %v1302 = vrot.slane %v1297, %v1301
        %v1303 = vlaneseq
        %v1304 = vshrl.u32 %v1303, 7
        %v1305 = vsub.s32 1, %v1304
        %v1306 = vrot.slane %v1297, %v1305
        %v1307 = vlaneseq
        %v1308 = vshrl.u32 %v1307, 7
        %v1309 = vsub.s32 2, %v1308
        %v1310 = vrot.slane %v1297, %v1309
        %v1311 = vlaneseq
        %v1312 = vshrl.u32 %v1311, 7
        %v1313 = vsub.s32 3, %v1312
        %v1314 = vrot.slane %v1297, %v1313
        %v1319 = vmul.f32 %v1294, %v1302
        %v1320 = vmul.f32 %v1293, %v1306
        %v1321 = vmul.f32 %v1292, %v1310
        %v1322 = vmul.f32 %v1295, %v1314
        %v1323 = vadd.f32 %v1144, %v1196
        %v1324 = vadd.f32 %v1145, %v1197
        %v1325 = vadd.f32 %v1146, %v1198
        %v1326 = vadd.f32 %v1147, %v1199
        %v1331 = vrot.slane %v1271, 6
        %v1332 = vrot.slane %v1272, 6
        %v1333 = vrot.slane %v1273, 6
        %v1334 = vrot.slane %v1274, 6
        %v1339 = vadd.f32 %v1223, %v1331
        %v1340 = vadd.f32 %v1224, %v1332
        %v1341 = vadd.f32 %v1225, %v1333
        %v1342 = vadd.f32 %v1226, %v1334
        %v1347 = vrot.slane %v1339, 2
        %v1348 = vrot.slane %v1340, 2
        %v1349 = vrot.slane %v1341, 2
        %v1350 = vrot.slane %v1342, 2
        %v1355 = vadd.f32 %v1323, %v1347
        %v1356 = vadd.f32 %v1324, %v1348
        %v1357 = vadd.f32 %v1325, %v1349
        %v1358 = vadd.f32 %v1326, %v1350
        %v1359 = vadd.f32 %v1355, %v1319
        %v1360 = vadd.f32 %v1356, %v1320
        %v1361 = vadd.f32 %v1357, %v1321
        %v1362 = vadd.f32 %v1358, %v1322
        %s1363 = scalar_lea.vmem %s250, 36
        %v1364 = vld [vmem:[%s1363] ss:$8 sm:$0xf]
        %v1369 = vcombine.low %v1359, %v1360
        %v1370 = vcombine.low %v1361, %v1362
        %v1372 = vunpack.c.l.s4 1966171168
        %v1373 = vunpack.c.0.s8 %v1372
        %v1374 = vlaneseq
        %v1375 = vshrl.u32 %v1374, 7
        %v1376 = vsub.s32 %v1373, %v1375
        %v1377 = vrot.slane %v1369, %v1376
        %v1379 = vunpack.c.l.s4 1966171168
        %v1380 = vunpack.c.0.s8 %v1379
        %v1381 = vlaneseq
        %v1382 = vshrl.u32 %v1381, 7
        %v1383 = vsub.s32 %v1380, %v1382
        %v1384 = vrot.slane %v1370, %v1383
        %v1385 = vcombine.low %v1377, %v1384
        %v1387 = vunpack.c.l.s4 1966171168
        %v1388 = vunpack.c.0.s8 %v1387
        %v1389 = vlaneseq
        %v1390 = vshrl.u32 %v1389, 7
        %v1391 = vsub.s32 %v1388, %v1390
        %v1392 = vrot.slane %v1385, %v1391
        %v1394 = vsub.f32 %v1364, %v1392
        %s1395 = sld [smem:[#allocation2]]
        %v1396 = vstv %s1395
        %v1397 = vsub.f32 %v1394, %v1396
        %v1398 = vlaneseq
        %vm1399 = vcmp.ge.s32.totalorder %v1398, 0
        %vm1400 = vcmp.lt.s32.totalorder %v1398, 512
        %vm1401 = vmand %vm1399, %vm1400
        %1402 = vst.msk [vmem:[%s245] sm:$0xf] %vm1401, %v1397
        %s1403 = sand.u32 %s160, 1
        %s1404 = scalar_lea.sflag [#allocation4], %s1403
        %s1405 = sand.u32 %s160, 1
        %s1406 = smul.addr %s1405, 4
        %s1407 = scalar_lea.vmem [#allocation3], %s1406
        // Predicated region
        $region45: #{tpu_custom_call.1} parent=43 // pred_check
          %p1408 = pneg %p170
        $region46: #{tpu_custom_call.1} parent=43 // pred_check_branch
          %1410 = sbr.rel (%p1408) target = $region48
        $region47: #{tpu_custom_call.1} parent=43 // pred_region
          %s1412 = ssub.s32 64, 64
          %1413 = vsyncadd %s1404, %s1412
          %s1414 = smul.addr %s21, 4
          %s1415 = smul.addr %s1414, 16
          %s1416 = scalar_lea.hbm %s6, %s1415
          %s1418 = sshll.u32 %s1407, 4
          %s1419 = int_to_ptr.vmem [resolvable:$true] %s1418
          %1421 = dma.vmem_to_hbm [thread:$0]  %s1419, 64, %s1416, %s1404
        $region48: #{tpu_custom_call.1} parent=43 // pred_fallthru
          _
      $region44: #{tpu_custom_call.1} parent=5 // pred_fallthru
        _
      %p1422 = scmp.le.s32.totalorder 2, %s16
      // Predicated region
      $region49: #{tpu_custom_call.1} parent=5 // pred_check
        %p1423 = pneg %p1422
      $region50: #{tpu_custom_call.1} parent=5 // pred_check_branch
        %1425 = sbr.rel (%p1423) target = $region52
      $region51: #{tpu_custom_call.1} parent=5 // pred_region
        %s1426 = ssub.s32 %s16, 2
        // Predicated region
        $region53: #{tpu_custom_call.1} parent=51 // pred_check
          %p1427 = pneg %p176
        $region54: #{tpu_custom_call.1} parent=51 // pred_check_branch
          %1429 = sbr.rel (%p1427) target = $region56
        $region55: #{tpu_custom_call.1} parent=51 // pred_region
          %s1430 = sand.u32 %s161, 1
          %s1431 = scalar_lea.sflag [#allocation4], %s1430
          %s1432 = sand.u32 %s161, 1
          %s1433 = smul.addr %s1432, 4
          %s1434 = scalar_lea.vmem [#allocation3], %s1433
          %1435 = dma.done %s1431, 64
        $region56: #{tpu_custom_call.1} parent=51 // pred_fallthru
          _
      $region52: #{tpu_custom_call.1} parent=5 // pred_fallthru
        _
    $region6: #{tpu_custom_call.1} parent=1 // loop_footer
      %s20 = sadd.s32 1, %s16
    $region7: #{tpu_custom_call.1} parent=1 // loop_footer_branch
      %15 = sbr.rel target = $region3
    $region8: #{tpu_custom_call.1} parent=1 // loop_exit
      _
    %1436 = vsyncpa [#allocation4], 1
    %s1437 = scalar_lea.sflag [#allocation4], 1
    %1438 = vsyncpa %s1437, 1

</llo_original>
